<compile_context>
chip_gen: v7x
topology: tpu7x:2x2x1
jax: 0.10.0
libtpu: 0.0.40
codegen_flags: <defaults>
</compile_context>

<pallas_src>
import functools

import numpy as np
import jax
import jax.numpy as jnp
from jax import lax
from jax.experimental import pallas as pl
from jax.experimental.pallas import tpu as pltpu

# Static problem configuration (implied by the module).
H, W = 16, 16
CIN, C1, C2 = 3, 16, 8
H2, W2 = H // 2, W // 2            # 8, 8   after pool1
H4, W4 = H2 // 2, W2 // 2          # 4, 4   after pool2
KH = KW = 3
NTAP = KH + 1                      # 4 strided row taps per conv (3 kernel rows x 2 row parities)

K1 = W * CIN                       # 48  : conv1 contraction dim (x_in, c_in)
N1 = 4 * W2 * C1                   # 512 : conv1 columns, ordered (yr, xr, x2, c1)
K2 = W2 * C1                       # 128 : conv2 contraction dim (x2_in, c1)
N2 = 4 * W4 * C2                   # 128 : conv2 columns, ordered (yr, xr, x4, c2)
NOUT = W4 * C2                     # 32  : output columns (x4, c2)

CB = 8                             # images per inner chunk (bounds live vregs: acc1 = 32 vregs)


def backbone_kernel(x_ref, t1_ref, b1_ref, t2_ref, b2_ref, out_ref, s1_ref):
    """Fused conv1+relu+pool1+conv2+relu+pool2 for one batch block.

    x_ref  : (H+2, bblk, 48) f32   zero-row-padded input, laid out (row, image, x*cin)
    t1_ref : (4, 48, 512)   bf16   conv1 row-Toeplitz taps, cols (yr, xr, x2, c1)
    b1_ref : (1, 128)       f32    conv1 bias tiled over x2 (added after the pool)
    t2_ref : (4, 128, 128)  bf16   conv2 row-Toeplitz taps, cols (yr, xr, x4, c2)
    b2_ref : (1, 32)        f32
    out_ref: (H4, bblk, 32) f32    (y4, image, x4*C2 + c2)
    s1_ref : VMEM (H2+2, CB, 128) f32 scratch: pooled conv1 rows with zero row halo
    """
    bblk = x_ref.shape[1]
    nchunk = bblk // CB

    # Zero row-halo of the pooled1 staging scratch (once per grid step; megacore safe).
    s1_ref[0:1, :, :] = jnp.zeros((1, CB, K2), jnp.float32)
    s1_ref[H2 + 1:H2 + 2, :, :] = jnp.zeros((1, CB, K2), jnp.float32)

    def chunk(c, carry):
        ib = pl.multiple_of(c * CB, CB)

        # ---- conv1: 4 strided row taps, columns (yr, xr, x2, c1) ----
        def c1_tap(t):
            slab = x_ref[pl.ds(t, H2, 2), pl.ds(ib, CB), :].reshape(H2 * CB, K1)
            return jnp.dot(slab.astype(jnp.bfloat16), t1_ref[t],
                           preferred_element_type=jnp.float32)

        acc1 = c1_tap(0)
        for t in range(1, NTAP):
            acc1 = acc1 + c1_tap(t)

        # 2x2 max-pool = max over the (yr, xr) lane blocks, then bias + ReLU
        # (bias is constant within each pooled window and ReLU is monotone).
        p1 = jnp.maximum(jnp.maximum(acc1[:, 0:128], acc1[:, 128:256]),
                         jnp.maximum(acc1[:, 256:384], acc1[:, 384:512]))
        p1 = jnp.maximum(p1 + b1_ref[...], 0.0)                 # (H2*CB, 128), cols (x2, c1)
        s1_ref[1:1 + H2, :, :] = p1.reshape(H2, CB, K2)

        # ---- conv2: 4 strided row taps over pooled1, columns (yr, xr, x4, c2) ----
        def c2_tap(t):
            slab = s1_ref[pl.ds(t, H4, 2), :, :].reshape(H4 * CB, K2)
            return jnp.dot(slab.astype(jnp.bfloat16), t2_ref[t],
                           preferred_element_type=jnp.float32)

        acc2 = c2_tap(0)
        for t in range(1, NTAP):
            acc2 = acc2 + c2_tap(t)

        p2 = jnp.maximum(jnp.maximum(acc2[:, 0:32], acc2[:, 32:64]),
                         jnp.maximum(acc2[:, 64:96], acc2[:, 96:128]))
        p2 = jnp.maximum(p2 + b2_ref[...], 0.0)                 # (H4*CB, 32), cols (x4, c2)
        out_ref[:, pl.ds(ib, CB), :] = p2.reshape(H4, CB, NOUT)
        return carry

    lax.fori_loop(0, nchunk, chunk, 0)


def _toeplitz(w_oihw, cout, cin, width):
    """Per-kernel-row Toeplitz T[dy]: (width*cin, 2*(width//2)*cout)
    mapping an input row (x_in, c_in) to conv outputs ordered (xr, x_half, c_out)."""
    w_hwio = jnp.transpose(w_oihw, (2, 3, 1, 0)).astype(jnp.float32)     # (3,3,cin,cout)
    shift = np.zeros((KW, width, width), np.float32)
    for dx in range(KW):
        for xo in range(width):
            xi = xo + dx - 1
            if 0 <= xi < width:
                shift[dx, xi, xo] = 1.0
    t = jnp.einsum('kmx,hkio->hmixo', jnp.asarray(shift), w_hwio)        # (3,width,cin,width,cout)
    half = width // 2
    t = t.reshape(KH, width, cin, half, 2, cout)                         # xout -> (x_half, xr)
    t = jnp.transpose(t, (0, 1, 2, 4, 3, 5))                             # (dy, xin, ci, xr, xh, co)
    return t.reshape(KH, width * cin, 2 * half * cout)


def _taps(tflat):
    """Stack the 3 kernel-row matrices into 4 strided-row taps covering both output-row
    parities in the columns: tap[t] = [T[dy=t] | T[dy=t-1]] (zero block when out of range)."""
    z = jnp.zeros(tflat.shape[1:], jnp.float32)
    taps = [
        jnp.concatenate([tflat[0], z], axis=1),
        jnp.concatenate([tflat[1], tflat[0]], axis=1),
        jnp.concatenate([tflat[2], tflat[1]], axis=1),
        jnp.concatenate([z, tflat[2]], axis=1),
    ]
    return jnp.stack(taps).astype(jnp.bfloat16)


@functools.partial(jax.jit, static_argnames=("block",))
def backbone_forward(x_nchw, w1, b1, w2, b2, block=32):
    """PyTorch-semantics forward. x_nchw: (B, 3, 16, 16) f32 -> (B, 8, 4, 4) f32."""
    B = x_nchw.shape[0]
    assert x_nchw.shape[1:] == (CIN, H, W), x_nchw.shape

    # Batch block: multiple of CB; keep >= 2 grid steps when possible (v7x megacore).
    bblk = min(block, CB * max(1, B // (2 * CB)))
    bblk = max(CB, (bblk // CB) * CB)
    nblk = -(-B // bblk)
    bpad = nblk * bblk

    # Glue: NCHW -> (padded row, image, x*cin).  One zero halo row above/below.
    x = jnp.transpose(x_nchw, (0, 2, 3, 1)).astype(jnp.float32).reshape(B, H, W * CIN)
    x = jnp.pad(x, ((0, bpad - B), (1, 1), (0, 0)))
    x = jnp.transpose(x, (1, 0, 2))                                      # (H+2, bpad, 48)

    t1 = _taps(_toeplitz(w1, C1, CIN, W))                                # (4, 48, 512) bf16
    t2 = _taps(_toeplitz(w2, C2, C1, W2))                                # (4, 128, 128) bf16
    b1t = jnp.tile(b1.astype(jnp.float32), W2).reshape(1, W2 * C1)       # (1, 128)
    b2t = jnp.tile(b2.astype(jnp.float32), W4).reshape(1, W4 * C2)       # (1, 32)

    out = pl.pallas_call(
        backbone_kernel,
        out_shape=jax.ShapeDtypeStruct((H4, bpad, NOUT), jnp.float32),
        grid_spec=pltpu.PrefetchScalarGridSpec(
            num_scalar_prefetch=0,
            grid=(nblk,),
            in_specs=[
                pl.BlockSpec((H + 2, bblk, K1), lambda i: (0, i, 0)),
                pl.BlockSpec((NTAP, K1, N1), lambda i: (0, 0, 0)),
                pl.BlockSpec((1, W2 * C1), lambda i: (0, 0)),
                pl.BlockSpec((NTAP, K2, N2), lambda i: (0, 0, 0)),
                pl.BlockSpec((1, W4 * C2), lambda i: (0, 0)),
            ],
            out_specs=pl.BlockSpec((H4, bblk, NOUT), lambda i: (0, i, 0)),
            scratch_shapes=[pltpu.VMEM((H2 + 2, CB, K2), jnp.float32)],
        ),
        compiler_params=pltpu.CompilerParams(dimension_semantics=("parallel",)),
    )(x, t1, b1t, t2, b2t)

    # (y4, image, x4*C2 + c2) -> NCHW
    out = out[:, :B, :].reshape(H4, B, W4, C2)
    return jnp.transpose(out, (1, 3, 0, 2))


def reference_forward(x_nchw, w1, b1, w2, b2):
    """Plain-JAX reference mirroring the PyTorch module (NCHW / OIHW)."""
    dn = ("NCHW", "OIHW", "NCHW")
    y = lax.conv_general_dilated(x_nchw, w1, (1, 1), "SAME",
                                 dimension_numbers=dn) + b1[None, :, None, None]
    y = jnp.maximum(y, 0.0)
    y = lax.reduce_window(y, -jnp.inf, lax.max, (1, 1, 2, 2), (1, 1, 2, 2), "VALID")
    y = lax.conv_general_dilated(y, w2, (1, 1), "SAME",
                                 dimension_numbers=dn) + b2[None, :, None, None]
    y = jnp.maximum(y, 0.0)
    y = lax.reduce_window(y, -jnp.inf, lax.max, (1, 1, 2, 2), (1, 1, 2, 2), "VALID")
    return y


if __name__ == "__main__":
    key = jax.random.PRNGKey(0)
    k1, k2, k3, k4, kx, kx2 = jax.random.split(key, 6)

    # Deterministic synthetic parameters (PyTorch Conv2d shapes: OIHW / bias).
    fan1 = CIN * KH * KW
    w1 = jax.random.uniform(k1, (C1, CIN, KH, KW), jnp.float32, -1.0, 1.0) / np.sqrt(fan1)
    b1 = jax.random.uniform(k2, (C1,), jnp.float32, -1.0, 1.0) / np.sqrt(fan1)
    fan2 = C1 * KH * KW
    w2 = jax.random.uniform(k3, (C2, C1, KH, KW), jnp.float32, -1.0, 1.0) / np.sqrt(fan2)
    b2 = jax.random.uniform(k4, (C2,), jnp.float32, -1.0, 1.0) / np.sqrt(fan2)

    # Primary check: small batch (as in the module's test).
    x = jax.random.normal(kx, (2, CIN, H, W), jnp.float32)
    out = jax.block_until_ready(backbone_forward(x, w1, b1, w2, b2))
    ref = reference_forward(x, w1, b1, w2, b2)
    assert out.shape == (2, C2, H4, W4), out.shape
    err = float(jnp.abs(out - ref).max())
    assert err < 5e-2, err        # bf16 matmul operands -> ~1e-2-scale error vs f32 reference

    # Secondary check: exercises multiple grid steps, multiple in-kernel chunks, batch padding.
    x2 = jax.random.normal(kx2, (40, CIN, H, W), jnp.float32)
    out2 = jax.block_until_ready(backbone_forward(x2, w1, b1, w2, b2))
    ref2 = reference_forward(x2, w1, b1, w2, b2)
    err2 = float(jnp.abs(out2 - ref2).max())
    assert err2 < 5e-2, err2

    print("KERNEL_OK")
</pallas_src>

<mosaic_0001>
module attributes {stable_mosaic.version = 11 : i64} {
  func.func @backbone_kernel(%arg0: i32, %arg1: memref<18x8x48xf32, #tpu.memory_space<vmem>>, %arg2: memref<4x48x512xbf16, #tpu.memory_space<vmem>>, %arg3: memref<1x128xf32, #tpu.memory_space<vmem>>, %arg4: memref<4x128x128xbf16, #tpu.memory_space<vmem>>, %arg5: memref<1x32xf32, #tpu.memory_space<vmem>>, %arg6: memref<4x8x32xf32, #tpu.memory_space<vmem>>, %arg7: memref<10x8x128xf32, #tpu.memory_space<vmem>>) attributes {dimension_semantics = [#tpu.dimension_semantics<parallel>], iteration_bounds = array<i64: 1>, scalar_prefetch = 0 : i64, scratch_operands = 1 : i64, tpu.core_type = #tpu.core_type<tc>, window_params = [{transform_indices = @transform_0, window_bounds = array<i64: 18, 8, 48>}, {pipeline_mode = #tpu.pipeline_mode<synchronous>, transform_indices = @transform_1, window_bounds = array<i64: 4, 48, 512>}, {pipeline_mode = #tpu.pipeline_mode<synchronous>, transform_indices = @transform_2, window_bounds = array<i64: 1, 128>}, {pipeline_mode = #tpu.pipeline_mode<synchronous>, transform_indices = @transform_3, window_bounds = array<i64: 4, 128, 128>}, {pipeline_mode = #tpu.pipeline_mode<synchronous>, transform_indices = @transform_4, window_bounds = array<i64: 1, 32>}, {transform_indices = @transform_5, window_bounds = array<i64: 4, 8, 32>}]} {
    %cst = arith.constant 0.000000e+00 : f32
    %0 = vector.broadcast %cst : f32 to vector<1x8x128xf32>
    %c0 = arith.constant 0 : index
    %c0_0 = arith.constant 0 : index
    %c0_1 = arith.constant 0 : index
    %1 = vector.load %arg7[%c0, %c0_0, %c0_1] : memref<10x8x128xf32, #tpu.memory_space<vmem>>, vector<1x8x128xf32>
    tpu.vector_store %arg7[%c0, %c0_0, %c0_1], %0 {strides = array<i32>} : memref<10x8x128xf32, #tpu.memory_space<vmem>>, vector<1x8x128xf32>,
    %cst_2 = arith.constant 0.000000e+00 : f32
    %2 = vector.broadcast %cst_2 : f32 to vector<1x8x128xf32>
    %c9 = arith.constant 9 : index
    %c0_3 = arith.constant 0 : index
    %c0_4 = arith.constant 0 : index
    %3 = vector.load %arg7[%c9, %c0_3, %c0_4] : memref<10x8x128xf32, #tpu.memory_space<vmem>>, vector<1x8x128xf32>
    tpu.vector_store %arg7[%c9, %c0_3, %c0_4], %2 {strides = array<i32>} : memref<10x8x128xf32, #tpu.memory_space<vmem>>, vector<1x8x128xf32>,
    %c0_i32 = arith.constant 0 : i32
    %c8_i32 = arith.constant 8 : i32
    %4 = arith.muli %c0_i32, %c8_i32 : i32
    %5 = tpu.assume_multiple %4, 8 : i32
    %c0_5 = arith.constant 0 : index
    %6 = arith.index_cast %5 : i32 to index
    %c0_6 = arith.constant 0 : index
    %7 = tpu.strided_load %arg1[%c0_5, %6, %c0_6] {strides = array<i32: 2, 1, 1>} : memref<18x8x48xf32, #tpu.memory_space<vmem>>, vector<8x8x48xf32>
    %8 = vector.shape_cast %7 : vector<8x8x48xf32> to vector<64x48xf32>
    %9 = arith.truncf %8 : vector<64x48xf32> to vector<64x48xbf16>
    %c0_7 = arith.constant 0 : index
    %c0_8 = arith.constant 0 : index
    %c0_9 = arith.constant 0 : index
    %10 = vector.load %arg2[%c0_7, %c0_8, %c0_9] : memref<4x48x512xbf16, #tpu.memory_space<vmem>>, vector<1x48x512xbf16>
    %11 = vector.shape_cast %10 : vector<1x48x512xbf16> to vector<48x512xbf16>
    %cst_10 = arith.constant dense<0.000000e+00> : vector<64x512xf32>
    %12 = tpu.matmul %9, %11, %cst_10 {dimension_numbers = #tpu.dot_dimension_numbers<[1], [0], [0], [1], [0, 0, 1, 1], [], []>} : vector<64x48xbf16>, vector<48x512xbf16>, vector<64x512xf32> -> vector<64x512xf32>
    %c1 = arith.constant 1 : index
    %13 = arith.index_cast %5 : i32 to index
    %c0_11 = arith.constant 0 : index
    %14 = tpu.strided_load %arg1[%c1, %13, %c0_11] {strides = array<i32: 2, 1, 1>} : memref<18x8x48xf32, #tpu.memory_space<vmem>>, vector<8x8x48xf32>
    %15 = vector.shape_cast %14 : vector<8x8x48xf32> to vector<64x48xf32>
    %16 = arith.truncf %15 : vector<64x48xf32> to vector<64x48xbf16>
    %c1_12 = arith.constant 1 : index
    %c0_13 = arith.constant 0 : index
    %c0_14 = arith.constant 0 : index
    %17 = vector.load %arg2[%c1_12, %c0_13, %c0_14] : memref<4x48x512xbf16, #tpu.memory_space<vmem>>, vector<1x48x512xbf16>
    %18 = vector.shape_cast %17 : vector<1x48x512xbf16> to vector<48x512xbf16>
    %cst_15 = arith.constant dense<0.000000e+00> : vector<64x512xf32>
    %19 = tpu.matmul %16, %18, %cst_15 {dimension_numbers = #tpu.dot_dimension_numbers<[1], [0], [0], [1], [0, 0, 1, 1], [], []>} : vector<64x48xbf16>, vector<48x512xbf16>, vector<64x512xf32> -> vector<64x512xf32>
    %20 = arith.addf %12, %19 : vector<64x512xf32>
    %c2 = arith.constant 2 : index
    %21 = arith.index_cast %5 : i32 to index
    %c0_16 = arith.constant 0 : index
    %22 = tpu.strided_load %arg1[%c2, %21, %c0_16] {strides = array<i32: 2, 1, 1>} : memref<18x8x48xf32, #tpu.memory_space<vmem>>, vector<8x8x48xf32>
    %23 = vector.shape_cast %22 : vector<8x8x48xf32> to vector<64x48xf32>
    %24 = arith.truncf %23 : vector<64x48xf32> to vector<64x48xbf16>
    %c2_17 = arith.constant 2 : index
    %c0_18 = arith.constant 0 : index
    %c0_19 = arith.constant 0 : index
    %25 = vector.load %arg2[%c2_17, %c0_18, %c0_19] : memref<4x48x512xbf16, #tpu.memory_space<vmem>>, vector<1x48x512xbf16>
    %26 = vector.shape_cast %25 : vector<1x48x512xbf16> to vector<48x512xbf16>
    %cst_20 = arith.constant dense<0.000000e+00> : vector<64x512xf32>
    %27 = tpu.matmul %24, %26, %cst_20 {dimension_numbers = #tpu.dot_dimension_numbers<[1], [0], [0], [1], [0, 0, 1, 1], [], []>} : vector<64x48xbf16>, vector<48x512xbf16>, vector<64x512xf32> -> vector<64x512xf32>
    %28 = arith.addf %20, %27 : vector<64x512xf32>
    %c3 = arith.constant 3 : index
    %29 = arith.index_cast %5 : i32 to index
    %c0_21 = arith.constant 0 : index
    %30 = tpu.strided_load %arg1[%c3, %29, %c0_21] {strides = array<i32: 2, 1, 1>} : memref<18x8x48xf32, #tpu.memory_space<vmem>>, vector<8x8x48xf32>
    %31 = vector.shape_cast %30 : vector<8x8x48xf32> to vector<64x48xf32>
    %32 = arith.truncf %31 : vector<64x48xf32> to vector<64x48xbf16>
    %c3_22 = arith.constant 3 : index
    %c0_23 = arith.constant 0 : index
    %c0_24 = arith.constant 0 : index
    %33 = vector.load %arg2[%c3_22, %c0_23, %c0_24] : memref<4x48x512xbf16, #tpu.memory_space<vmem>>, vector<1x48x512xbf16>
    %34 = vector.shape_cast %33 : vector<1x48x512xbf16> to vector<48x512xbf16>
    %cst_25 = arith.constant dense<0.000000e+00> : vector<64x512xf32>
    %35 = tpu.matmul %32, %34, %cst_25 {dimension_numbers = #tpu.dot_dimension_numbers<[1], [0], [0], [1], [0, 0, 1, 1], [], []>} : vector<64x48xbf16>, vector<48x512xbf16>, vector<64x512xf32> -> vector<64x512xf32>
    %36 = arith.addf %28, %35 : vector<64x512xf32>
    %37 = vector.extract_strided_slice %36 {offsets = [0, 0], sizes = [64, 128], strides = [1, 1]} : vector<64x512xf32> to vector<64x128xf32>
    %38 = vector.extract_strided_slice %36 {offsets = [0, 128], sizes = [64, 128], strides = [1, 1]} : vector<64x512xf32> to vector<64x128xf32>
    %39 = arith.maximumf %37, %38 : vector<64x128xf32>
    %40 = vector.extract_strided_slice %36 {offsets = [0, 256], sizes = [64, 128], strides = [1, 1]} : vector<64x512xf32> to vector<64x128xf32>
    %41 = vector.extract_strided_slice %36 {offsets = [0, 384], sizes = [64, 128], strides = [1, 1]} : vector<64x512xf32> to vector<64x128xf32>
    %42 = arith.maximumf %40, %41 : vector<64x128xf32>
    %43 = arith.maximumf %39, %42 : vector<64x128xf32>
    %c0_26 = arith.constant 0 : index
    %c0_27 = arith.constant 0 : index
    %44 = vector.load %arg3[%c0_26, %c0_27] : memref<1x128xf32, #tpu.memory_space<vmem>>, vector<1x128xf32>
    %45 = vector.broadcast %44 : vector<1x128xf32> to vector<64x128xf32>
    %46 = arith.addf %43, %45 : vector<64x128xf32>
    %cst_28 = arith.constant 0.000000e+00 : f32
    %47 = vector.broadcast %cst_28 : f32 to vector<64x128xf32>
    %48 = arith.maximumf %46, %47 : vector<64x128xf32>
    %49 = vector.shape_cast %48 : vector<64x128xf32> to vector<8x8x128xf32>
    %c1_29 = arith.constant 1 : index
    %c0_30 = arith.constant 0 : index
    %c0_31 = arith.constant 0 : index
    %50 = vector.load %arg7[%c1_29, %c0_30, %c0_31] : memref<10x8x128xf32, #tpu.memory_space<vmem>>, vector<8x8x128xf32>
    tpu.vector_store %arg7[%c1_29, %c0_30, %c0_31], %49 {strides = array<i32>} : memref<10x8x128xf32, #tpu.memory_space<vmem>>, vector<8x8x128xf32>,
    %c0_32 = arith.constant 0 : index
    %c0_33 = arith.constant 0 : index
    %c0_34 = arith.constant 0 : index
    %51 = tpu.strided_load %arg7[%c0_32, %c0_33, %c0_34] {strides = array<i32: 2, 1, 1>} : memref<10x8x128xf32, #tpu.memory_space<vmem>>, vector<4x8x128xf32>
    %52 = vector.shape_cast %51 : vector<4x8x128xf32> to vector<32x128xf32>
    %53 = arith.truncf %52 : vector<32x128xf32> to vector<32x128xbf16>
    %c0_35 = arith.constant 0 : index
    %c0_36 = arith.constant 0 : index
    %c0_37 = arith.constant 0 : index
    %54 = vector.load %arg4[%c0_35, %c0_36, %c0_37] : memref<4x128x128xbf16, #tpu.memory_space<vmem>>, vector<1x128x128xbf16>
    %55 = vector.shape_cast %54 : vector<1x128x128xbf16> to vector<128x128xbf16>
    %cst_38 = arith.constant dense<0.000000e+00> : vector<32x128xf32>
    %56 = tpu.matmul %53, %55, %cst_38 {dimension_numbers = #tpu.dot_dimension_numbers<[1], [0], [0], [1], [0, 0, 1, 1], [], []>} : vector<32x128xbf16>, vector<128x128xbf16>, vector<32x128xf32> -> vector<32x128xf32>
    %c1_39 = arith.constant 1 : index
    %c0_40 = arith.constant 0 : index
    %c0_41 = arith.constant 0 : index
    %57 = tpu.strided_load %arg7[%c1_39, %c0_40, %c0_41] {strides = array<i32: 2, 1, 1>} : memref<10x8x128xf32, #tpu.memory_space<vmem>>, vector<4x8x128xf32>
    %58 = vector.shape_cast %57 : vector<4x8x128xf32> to vector<32x128xf32>
    %59 = arith.truncf %58 : vector<32x128xf32> to vector<32x128xbf16>
    %c1_42 = arith.constant 1 : index
    %c0_43 = arith.constant 0 : index
    %c0_44 = arith.constant 0 : index
    %60 = vector.load %arg4[%c1_42, %c0_43, %c0_44] : memref<4x128x128xbf16, #tpu.memory_space<vmem>>, vector<1x128x128xbf16>
    %61 = vector.shape_cast %60 : vector<1x128x128xbf16> to vector<128x128xbf16>
    %cst_45 = arith.constant dense<0.000000e+00> : vector<32x128xf32>
    %62 = tpu.matmul %59, %61, %cst_45 {dimension_numbers = #tpu.dot_dimension_numbers<[1], [0], [0], [1], [0, 0, 1, 1], [], []>} : vector<32x128xbf16>, vector<128x128xbf16>, vector<32x128xf32> -> vector<32x128xf32>
    %63 = arith.addf %56, %62 : vector<32x128xf32>
    %c2_46 = arith.constant 2 : index
    %c0_47 = arith.constant 0 : index
    %c0_48 = arith.constant 0 : index
    %64 = tpu.strided_load %arg7[%c2_46, %c0_47, %c0_48] {strides = array<i32: 2, 1, 1>} : memref<10x8x128xf32, #tpu.memory_space<vmem>>, vector<4x8x128xf32>
    %65 = vector.shape_cast %64 : vector<4x8x128xf32> to vector<32x128xf32>
    %66 = arith.truncf %65 : vector<32x128xf32> to vector<32x128xbf16>
    %c2_49 = arith.constant 2 : index
    %c0_50 = arith.constant 0 : index
    %c0_51 = arith.constant 0 : index
    %67 = vector.load %arg4[%c2_49, %c0_50, %c0_51] : memref<4x128x128xbf16, #tpu.memory_space<vmem>>, vector<1x128x128xbf16>
    %68 = vector.shape_cast %67 : vector<1x128x128xbf16> to vector<128x128xbf16>
    %cst_52 = arith.constant dense<0.000000e+00> : vector<32x128xf32>
    %69 = tpu.matmul %66, %68, %cst_52 {dimension_numbers = #tpu.dot_dimension_numbers<[1], [0], [0], [1], [0, 0, 1, 1], [], []>} : vector<32x128xbf16>, vector<128x128xbf16>, vector<32x128xf32> -> vector<32x128xf32>
    %70 = arith.addf %63, %69 : vector<32x128xf32>
    %c3_53 = arith.constant 3 : index
    %c0_54 = arith.constant 0 : index
    %c0_55 = arith.constant 0 : index
    %71 = tpu.strided_load %arg7[%c3_53, %c0_54, %c0_55] {strides = array<i32: 2, 1, 1>} : memref<10x8x128xf32, #tpu.memory_space<vmem>>, vector<4x8x128xf32>
    %72 = vector.shape_cast %71 : vector<4x8x128xf32> to vector<32x128xf32>
    %73 = arith.truncf %72 : vector<32x128xf32> to vector<32x128xbf16>
    %c3_56 = arith.constant 3 : index
    %c0_57 = arith.constant 0 : index
    %c0_58 = arith.constant 0 : index
    %74 = vector.load %arg4[%c3_56, %c0_57, %c0_58] : memref<4x128x128xbf16, #tpu.memory_space<vmem>>, vector<1x128x128xbf16>
    %75 = vector.shape_cast %74 : vector<1x128x128xbf16> to vector<128x128xbf16>
    %cst_59 = arith.constant dense<0.000000e+00> : vector<32x128xf32>
    %76 = tpu.matmul %73, %75, %cst_59 {dimension_numbers = #tpu.dot_dimension_numbers<[1], [0], [0], [1], [0, 0, 1, 1], [], []>} : vector<32x128xbf16>, vector<128x128xbf16>, vector<32x128xf32> -> vector<32x128xf32>
    %77 = arith.addf %70, %76 : vector<32x128xf32>
    %78 = vector.extract_strided_slice %77 {offsets = [0, 0], sizes = [32, 32], strides = [1, 1]} : vector<32x128xf32> to vector<32x32xf32>
    %79 = vector.extract_strided_slice %77 {offsets = [0, 32], sizes = [32, 32], strides = [1, 1]} : vector<32x128xf32> to vector<32x32xf32>
    %80 = arith.maximumf %78, %79 : vector<32x32xf32>
    %81 = vector.extract_strided_slice %77 {offsets = [0, 64], sizes = [32, 32], strides = [1, 1]} : vector<32x128xf32> to vector<32x32xf32>
    %82 = vector.extract_strided_slice %77 {offsets = [0, 96], sizes = [32, 32], strides = [1, 1]} : vector<32x128xf32> to vector<32x32xf32>
    %83 = arith.maximumf %81, %82 : vector<32x32xf32>
    %84 = arith.maximumf %80, %83 : vector<32x32xf32>
    %c0_60 = arith.constant 0 : index
    %c0_61 = arith.constant 0 : index
    %85 = vector.load %arg5[%c0_60, %c0_61] : memref<1x32xf32, #tpu.memory_space<vmem>>, vector<1x32xf32>
    %86 = vector.broadcast %85 : vector<1x32xf32> to vector<32x32xf32>
    %87 = arith.addf %84, %86 : vector<32x32xf32>
    %cst_62 = arith.constant 0.000000e+00 : f32
    %88 = vector.broadcast %cst_62 : f32 to vector<32x32xf32>
    %89 = arith.maximumf %87, %88 : vector<32x32xf32>
    %90 = vector.shape_cast %89 : vector<32x32xf32> to vector<4x8x32xf32>
    %c0_63 = arith.constant 0 : index
    %91 = arith.index_cast %5 : i32 to index
    %c0_64 = arith.constant 0 : index
    %92 = vector.load %arg6[%c0_63, %91, %c0_64] : memref<4x8x32xf32, #tpu.memory_space<vmem>>, vector<4x8x32xf32>
    tpu.vector_store %arg6[%c0_63, %91, %c0_64], %90 {strides = array<i32>} : memref<4x8x32xf32, #tpu.memory_space<vmem>>, vector<4x8x32xf32>,
    %c1_i32 = arith.constant 1 : i32
    return
  }
  func.func @transform_0(%arg0: i32) -> (i32, i32, i32) {
    %c0_i32 = arith.constant 0 : i32
    %c0_i32_0 = arith.constant 0 : i32
    %c0_i32_1 = arith.constant 0 : i32
    return %c0_i32, %arg0, %c0_i32_0 : i32, i32, i32
  }
  func.func @transform_1(%arg0: i32) -> (i32, i32, i32) {
    %c0_i32 = arith.constant 0 : i32
    %c0_i32_0 = arith.constant 0 : i32
    %c0_i32_1 = arith.constant 0 : i32
    %c0_i32_2 = arith.constant 0 : i32
    return %c0_i32, %c0_i32_0, %c0_i32_1 : i32, i32, i32
  }
  func.func @transform_2(%arg0: i32) -> (i32, i32) {
    %c0_i32 = arith.constant 0 : i32
    %c0_i32_0 = arith.constant 0 : i32
    %c0_i32_1 = arith.constant 0 : i32
    return %c0_i32, %c0_i32_0 : i32, i32
  }
  func.func @transform_3(%arg0: i32) -> (i32, i32, i32) {
    %c0_i32 = arith.constant 0 : i32
    %c0_i32_0 = arith.constant 0 : i32
    %c0_i32_1 = arith.constant 0 : i32
    %c0_i32_2 = arith.constant 0 : i32
    return %c0_i32, %c0_i32_0, %c0_i32_1 : i32, i32, i32
  }
  func.func @transform_4(%arg0: i32) -> (i32, i32) {
    %c0_i32 = arith.constant 0 : i32
    %c0_i32_0 = arith.constant 0 : i32
    %c0_i32_1 = arith.constant 0 : i32
    return %c0_i32, %c0_i32_0 : i32, i32
  }
  func.func @transform_5(%arg0: i32) -> (i32, i32, i32) {
    %c0_i32 = arith.constant 0 : i32
    %c0_i32_0 = arith.constant 0 : i32
    %c0_i32_1 = arith.constant 0 : i32
    return %c0_i32, %arg0, %c0_i32_0 : i32, i32, i32
  }
}

</mosaic_0001>

<llo_original>
// kernel: tile.13
$region0: #{tile.13}
  #allocation0 [shape = 's32[1]{0}', space=sflag, size = 0x4, scoped, tag = 'scoped memory for tile.13']
  %s0 = inlined_call_operand.vmem [shape: f32[16], index: 0, kind: input, shape index: {}]
  %s1 = inlined_call_operand.vmem [shape: f32[8,16], index: 1, kind: output, shape index: {}]
  // Predicated region
  $region2: #{tile.13} parent=0 // pred_check
    _
  $region3: #{tile.13} parent=0 // pred_check_branch
    %3 = sbr.rel (0) target = $region5
  $region4: #{tile.13} parent=0 // pred_region
    _
  $region5: #{tile.13} parent=0 // pred_fallthru
    _
  %v4 = vld [vmem:[%s0] ss:$0 sm:$0xff]
  %5 = vst [vmem:[%s1] sm:$0xff] %v4

// kernel: tile.14
$region0: #{tile.14}
  %s0 = inlined_call_operand.vmem [shape: f32[8,16], index: 0, kind: input, shape index: {}]
  %s1 = inlined_call_operand.vmem [shape: f32[1,128], index: 1, kind: output, shape index: {}]
  $region1: #{tile.14} parent=0
    #allocation0 [shape = 'u8[4096]{0}', space=vmem, size = 0x1000, scoped, tag = 'scoped mem for output reshape']
    %v2 = vld [vmem:[%s0] sm:$0x1]
    %vm3 = vcmask 130048
    %4 = vst.msk [vmem:[#allocation0] sm:$0x1] %vm3, %v2
    %s5 = scalar_lea.vmem %s0, 7
    %v6 = vld [vmem:[%s5] sm:$0x1]
    %7 = vrot.lane.b32.xlu0 %v6, 112
    %v8 = vpop.permute.xlu0 %7
    %vm9 = vcmask 1048448
    %10 = vst.msk [vmem:[#allocation0] sm:$0x1] %vm9, %v8
    %s11 = scalar_lea.vmem %s0, 6
    %v12 = vld [vmem:[%s11] sm:$0x1]
    %13 = vrot.lane.b32.xlu0 %v12, 96
    %v14 = vpop.permute.xlu0 %13
    %vm15 = vcmask 917248
    %16 = vst.msk [vmem:[#allocation0] sm:$0x1] %vm15, %v14
    %s17 = scalar_lea.vmem %s0, 5
    %v18 = vld [vmem:[%s17] sm:$0x1]
    %19 = vrot.lane.b32.xlu0 %v18, 80
    %v20 = vpop.permute.xlu0 %19
    %vm21 = vcmask 786048
    %22 = vst.msk [vmem:[#allocation0] sm:$0x1] %vm21, %v20
    %s23 = scalar_lea.vmem %s0, 4
    %v24 = vld [vmem:[%s23] sm:$0x1]
    %25 = vrot.lane.b32.xlu0 %v24, 64
    %v26 = vpop.permute.xlu0 %25
    %vm27 = vcmask 654848
    %28 = vst.msk [vmem:[#allocation0] sm:$0x1] %vm27, %v26
    %s29 = scalar_lea.vmem %s0, 3
    %v30 = vld [vmem:[%s29] sm:$0x1]
    %31 = vrot.lane.b32.xlu0 %v30, 48
    %v32 = vpop.permute.xlu0 %31
    %vm33 = vcmask 523648
    %34 = vst.msk [vmem:[#allocation0] sm:$0x1] %vm33, %v32
    %s35 = scalar_lea.vmem %s0, 2
    %v36 = vld [vmem:[%s35] sm:$0x1]
    %37 = vrot.lane.b32.xlu0 %v36, 32
    %v38 = vpop.permute.xlu0 %37
    %vm39 = vcmask 392448
    %40 = vst.msk [vmem:[#allocation0] sm:$0x1] %vm39, %v38
    %s41 = scalar_lea.vmem %s0, 1
    %v42 = vld [vmem:[%s41] sm:$0x1]
    %43 = vrot.lane.b32.xlu0 %v42, 16
    %v44 = vpop.permute.xlu0 %43
    %vm45 = vcmask 261248
    %46 = vst.msk [vmem:[#allocation0] sm:$0x1] %vm45, %v44
    %s48 = sshllo.u32 0, 1
    %v50 = vld [vmem:[#allocation0] sm:%s48]
    %s51 = sshllo.u32 0, 1
    %52 = vst [vmem:[%s1] sm:%s51] %v50

// kernel: tile.18
$region0: #{tile.18}
  #allocation0 [shape = 's32[1]{0}', space=sflag, size = 0x4, scoped, tag = 'scoped memory for tile.18']
  %s0 = inlined_call_operand.vmem [shape: f32[8], index: 0, kind: input, shape index: {}]
  %s1 = inlined_call_operand.vmem [shape: f32[4,8], index: 1, kind: output, shape index: {}]
  // Predicated region
  $region2: #{tile.18} parent=0 // pred_check
    _
  $region3: #{tile.18} parent=0 // pred_check_branch
    %3 = sbr.rel (0) target = $region5
  $region4: #{tile.18} parent=0 // pred_region
    _
  $region5: #{tile.18} parent=0 // pred_fallthru
    _
  %v4 = vld [vmem:[%s0] ss:$0 sm:$0xff]
  %5 = vst [vmem:[%s1] sm:$0xf] %v4

// kernel: tile.19
$region0: #{tile.19}
  %s0 = inlined_call_operand.vmem [shape: f32[4,8], index: 0, kind: input, shape index: {}]
  %s1 = inlined_call_operand.vmem [shape: f32[1,32], index: 1, kind: output, shape index: {}]
  $region1: #{tile.19} parent=0
    #allocation0 [shape = 'u8[4096]{0}', space=vmem, size = 0x1000, scoped, tag = 'scoped mem for output reshape']
    #allocation1 [shape = 'u8[4096]{0}', space=vmem, size = 0x1000, scoped, tag = 'scoped mem for input reshape']
    %s3 = sshllo.u32 0, 4
    %v4 = vld [vmem:[%s0] sm:%s3]
    %5 = vst [vmem:[#allocation1] sm:%s3] %v4
    %v6 = vld [vmem:[#allocation1] sm:$0x1]
    %vm7 = vcmask 64512
    %8 = vst.msk [vmem:[#allocation0] sm:$0x1] %vm7, %v6
    %s9 = scalar_lea.vmem [#allocation1], 3
    %v10 = vld [vmem:[%s9] sm:$0x1]
    %11 = vrot.lane.b32.xlu0 %v10, 24
    %v12 = vpop.permute.xlu0 %11
    %vm13 = vcmask 261312
    %14 = vst.msk [vmem:[#allocation0] sm:$0x1] %vm13, %v12
    %s15 = scalar_lea.vmem [#allocation1], 2
    %v16 = vld [vmem:[%s15] sm:$0x1]
    %17 = vrot.lane.b32.xlu0 %v16, 16
    %v18 = vpop.permute.xlu0 %17
    %vm19 = vcmask 195712
    %20 = vst.msk [vmem:[#allocation0] sm:$0x1] %vm19, %v18
    %s21 = scalar_lea.vmem [#allocation1], 1
    %v22 = vld [vmem:[%s21] sm:$0x1]
    %23 = vrot.lane.b32.xlu0 %v22, 8
    %v24 = vpop.permute.xlu0 %23
    %vm25 = vcmask 130112
    %26 = vst.msk [vmem:[#allocation0] sm:$0x1] %vm25, %v24
    %s28 = sshllo.u32 0, 1
    %v30 = vld [vmem:[#allocation0] sm:%s28]
    %s31 = sshllo.u32 0, 1
    %32 = vst [vmem:[%s1] sm:%s31] %v30

// kernel: backbone_forward.1
$region0: #{backbone_forward.1}
  #allocation0 [shape = 'u32[]', space=smem, size = 0x4, offset = 0x4, fixed_abs, tag = 'smem constant byte address 0x4 - core index']
  #allocation1 [shape = 'u32[144,128]{1,0:T(1,128)}', space=vmem, size = 0x12000, scoped, tag = 'internal scratch']
  #allocation2 [shape = 'f32[10,8,128]{2,1,0:T(8,128)}', space=vmem, size = 0xa000, scoped, tag = 'scratch operand']
  %s0 = inlined_call_operand.vmem [shape: f32[18,8,48], index: 0, kind: input, shape index: {}]
  %s1 = inlined_call_operand.vmem [shape: bf16[4,48,512], index: 1, kind: input, shape index: {}]
  %s2 = inlined_call_operand.vmem [shape: f32[1,128], index: 2, kind: input, shape index: {}]
  %s3 = inlined_call_operand.vmem [shape: bf16[4,128,128], index: 3, kind: input, shape index: {}]
  %s4 = inlined_call_operand.vmem [shape: f32[1,32], index: 4, kind: input, shape index: {}]
  %s5 = inlined_call_operand.vmem [shape: f32[4,8,32], index: 5, kind: output, shape index: {}]
  %s6 = sld [smem:[#allocation0]]
  $region30: #{backbone_forward.1} parent=0
    _
  %s8 = ssub.s32 1, %s6
  %s9 = scalar_select 0, %s8, %s6
  // Predicated region
  $region2: #{backbone_forward.1} parent=0 // pred_check
    _
  $region3: #{backbone_forward.1} parent=0 // pred_check_branch
    %11 = sbr.rel (0) target = $region5
  $region4: #{backbone_forward.1} parent=0 // pred_region
    _
  $region5: #{backbone_forward.1} parent=0 // pred_fallthru
    _
  // Predicated region
  $region6: #{backbone_forward.1} parent=0 // pred_check
    _
  $region7: #{backbone_forward.1} parent=0 // pred_check_branch
    %13 = sbr.rel (0) target = $region9
  $region8: #{backbone_forward.1} parent=0 // pred_region
    _
  $region9: #{backbone_forward.1} parent=0 // pred_fallthru
    _
  // Predicated region
  $region10: #{backbone_forward.1} parent=0 // pred_check
    _
  $region11: #{backbone_forward.1} parent=0 // pred_check_branch
    %15 = sbr.rel (0) target = $region13
  $region12: #{backbone_forward.1} parent=0 // pred_region
    _
  $region13: #{backbone_forward.1} parent=0 // pred_fallthru
    _
  // Predicated region
  $region14: #{backbone_forward.1} parent=0 // pred_check
    _
  $region15: #{backbone_forward.1} parent=0 // pred_check_branch
    %17 = sbr.rel (0) target = $region17
  $region16: #{backbone_forward.1} parent=0 // pred_region
    _
  $region17: #{backbone_forward.1} parent=0 // pred_fallthru
    _
  // Predicated region
  $region18: #{backbone_forward.1} parent=0 // pred_check
    _
  $region19: #{backbone_forward.1} parent=0 // pred_check_branch
    %19 = sbr.rel (0) target = $region21
  $region20: #{backbone_forward.1} parent=0 // pred_region
    _
  $region21: #{backbone_forward.1} parent=0 // pred_fallthru
    _
  %21 = vst [vmem:[#allocation2] sm:$0xff] 0.0
  %s22 = scalar_lea.vmem [#allocation2], 72
  %23 = vst [vmem:[%s22] sm:$0xff] 0.0
  %v24 = vld [vmem:[%s0] sm:$0xff]
  %v25 = vld [vmem:[%s0 + $0x10] sm:$0xff]
  %v26 = vld [vmem:[%s0 + $0x20] sm:$0xff]
  %v27 = vld [vmem:[%s0 + $0x30] sm:$0xff]
  %v28 = vld [vmem:[%s0 + $0x40] sm:$0xff]
  %v29 = vld [vmem:[%s0 + $0x50] sm:$0xff]
  %v30 = vld [vmem:[%s0 + $0x60] sm:$0xff]
  %v31 = vld [vmem:[%s0 + $0x70] sm:$0xff]
  %v32 = vpack.c.bf16 %v25, %v24
  %v33 = vpack.c.bf16 %v27, %v26
  %v34 = vpack.c.bf16 %v29, %v28
  %v35 = vpack.c.bf16 %v31, %v30
  %v36 = vld [vmem:[%s1] sm:$0xff]
  %v37 = vld [vmem:[%s1 + $0x8] sm:$0xff]
  %v38 = vld [vmem:[%s1 + $0x10] sm:$0xff]
  %v39 = vld [vmem:[%s1 + $0x18] sm:$0xff]
  %v40 = vld [vmem:[%s1 + $0x20] sm:$0xff]
  %v41 = vld [vmem:[%s1 + $0x28] sm:$0xff]
  %v42 = vld [vmem:[%s1 + $0x30] sm:$0xff]
  %v43 = vld [vmem:[%s1 + $0x38] sm:$0xff]
  %v44 = vld [vmem:[%s1 + $0x40] sm:$0xff]
  %v45 = vld [vmem:[%s1 + $0x48] sm:$0xff]
  %v46 = vld [vmem:[%s1 + $0x50] sm:$0xff]
  %v47 = vld [vmem:[%s1 + $0x58] sm:$0xff]
  %s48 = sadd.s32 0, 8
  %s49 = scalar_lea.vmem %s0, %s48
  %v50 = vld [vmem:[%s49] sm:$0xff]
  %v51 = vld [vmem:[%s49 + $0x10] sm:$0xff]
  %v52 = vld [vmem:[%s49 + $0x20] sm:$0xff]
  %v53 = vld [vmem:[%s49 + $0x30] sm:$0xff]
  %v54 = vld [vmem:[%s49 + $0x40] sm:$0xff]
  %v55 = vld [vmem:[%s49 + $0x50] sm:$0xff]
  %v56 = vld [vmem:[%s49 + $0x60] sm:$0xff]
  %v57 = vld [vmem:[%s49 + $0x70] sm:$0xff]
  %v58 = vpack.c.bf16 %v51, %v50
  %v59 = vpack.c.bf16 %v53, %v52
  %v60 = vpack.c.bf16 %v55, %v54
  %v61 = vpack.c.bf16 %v57, %v56
  %s62 = scalar_lea.vmem %s1, 96
  %v63 = vld [vmem:[%s62] sm:$0xff]
  %v64 = vld [vmem:[%s62 + $0x8] sm:$0xff]
  %v65 = vld [vmem:[%s62 + $0x10] sm:$0xff]
  %v66 = vld [vmem:[%s62 + $0x18] sm:$0xff]
  %v67 = vld [vmem:[%s62 + $0x20] sm:$0xff]
  %v68 = vld [vmem:[%s62 + $0x28] sm:$0xff]
  %v69 = vld [vmem:[%s62 + $0x30] sm:$0xff]
  %v70 = vld [vmem:[%s62 + $0x38] sm:$0xff]
  %v71 = vld [vmem:[%s62 + $0x40] sm:$0xff]
  %v72 = vld [vmem:[%s62 + $0x48] sm:$0xff]
  %v73 = vld [vmem:[%s62 + $0x50] sm:$0xff]
  %v74 = vld [vmem:[%s62 + $0x58] sm:$0xff]
  %v87 = vunpack.c.l.b16 %v63
  %v88 = vunpack.c.h.b16 %v63
  %v89 = vunpack.c.l.b16 %v64
  %v90 = vunpack.c.h.b16 %v64
  %v91 = vunpack.c.l.b16 %v65
  %v92 = vunpack.c.h.b16 %v65
  %v93 = vunpack.c.l.b16 %v66
  %v94 = vunpack.c.h.b16 %v66
  %v95 = vunpack.c.l.b16 %v67
  %v96 = vunpack.c.h.b16 %v67
  %v97 = vunpack.c.l.b16 %v68
  %v98 = vunpack.c.h.b16 %v68
  %v99 = vunpack.c.l.b16 %v69
  %v100 = vunpack.c.h.b16 %v69
  %v101 = vunpack.c.l.b16 %v70
  %v102 = vunpack.c.h.b16 %v70
  %v103 = vunpack.c.l.b16 %v71
  %v104 = vunpack.c.h.b16 %v71
  %v105 = vunpack.c.l.b16 %v72
  %v106 = vunpack.c.h.b16 %v72
  %v107 = vunpack.c.l.b16 %v73
  %v108 = vunpack.c.h.b16 %v73
  %v109 = vunpack.c.l.b16 %v74
  %v110 = vunpack.c.h.b16 %v74
  %v111 = vpack.c.b16 %v91, %v87
  %v112 = vpack.c.b16 %v92, %v88
  %v113 = vpack.c.b16 %v93, %v89
  %v114 = vpack.c.b16 %v94, %v90
  %v115 = vpack.c.b16 %v99, %v95
  %v116 = vpack.c.b16 %v100, %v96
  %v117 = vpack.c.b16 %v101, %v97
  %v118 = vpack.c.b16 %v102, %v98
  %v119 = vpack.c.b16 %v107, %v103
  %v120 = vpack.c.b16 %v108, %v104
  %v121 = vpack.c.b16 %v109, %v105
  %v122 = vpack.c.b16 %v110, %v106
  %vm135 = vcmask 392192
  %v137 = vsel %vm135, %v58, 0
  %v140 = vsel %vm135, %v59, 0
  %v143 = vsel %vm135, %v60, 0
  %v146 = vsel %vm135, %v61, 0
  %148 = vmatprep.subr.bf16.mxu0 %v112
  %149 = vmatpush1.bf16.msra.mxu0 %v111
  %150 = vmatprep.subr.bf16.mxu0 %v116
  %151 = vmatpush1.bf16.msra.mxu0 %v115
  %152 = vmatprep.subr.bf16.mxu0 %v120
  %153 = vmatpush1.bf16.msra.mxu0 %v119
  %154 = vmatprep.subr.bf16.mxu0 0
  %155 = vmatpush1.bf16.msra.mxu0 0
  %156 = vmatprep.subr.bf16.mxu0 0
  %157 = vmatpush1.bf16.msra.mxu0 0
  %158 = vmatprep.subr.bf16.mxu0 0
  %159 = vmatpush1.bf16.msra.mxu0 0
  %160 = vmatprep.subr.bf16.mxu0 0
  %161 = vmatpush1.bf16.msra.mxu0 0
  %162 = vmatprep.subr.bf16.mxu0 0
  %163 = vmatpush1.bf16.msra.mxu0 0
  %164 = vmatprep.subr.bf16.mxu0 0
  %165 = vmatpush1.bf16.msra.mxu0 0
  %166 = vmatprep.subr.bf16.mxu0 0
  %167 = vmatpush1.bf16.msra.mxu0 0
  %168 = vmatprep.subr.bf16.mxu0 0
  %169 = vmatpush1.bf16.msra.mxu0 0
  %170 = vmatprep.subr.bf16.mxu0 0
  %171 = vmatpush1.bf16.msra.mxu0 0
  %172 = vmatprep.subr.bf16.mxu0 0
  %173 = vmatpush1.bf16.msra.mxu0 0
  %174 = vmatprep.subr.bf16.mxu0 0
  %175 = vmatpush1.bf16.msra.mxu0 0
  %176 = vmatprep.subr.bf16.mxu0 0
  %177 = vmatpush1.bf16.msra.mxu0 0
  %178 = vmatprep.subr.bf16.mxu0 0
  %179 = vmatpush1.bf16.msra.mxu0 0
  %180 = vmatprep.mubr.bf16.mxu0 0
  %181 = vmatmul.mubr.bf16.gmra.mrb[0].mxu0 %v137
  %v182 = vpop.f32.mrb[0].mxu0
  %v183 = vadd.f32 0.0, %v182
  %v184 = vpop.f32.mrb[0].mxu0
  %v185 = vadd.f32 0.0, %v184
  %v186 = vpop.f32.mrb[0].mxu0
  %v187 = vadd.f32 0.0, %v186
  %v188 = vpop.f32.mrb[0].mxu0
  %v189 = vadd.f32 0.0, %v188
  %190 = vmatprep.mubr.bf16.mxu0 0
  %191 = vmatmul.mubr.bf16.gmra.mrb[0].mxu0 %v140
  %v192 = vpop.f32.mrb[0].mxu0
  %v193 = vadd.f32 0.0, %v192
  %v194 = vpop.f32.mrb[0].mxu0
  %v195 = vadd.f32 0.0, %v194
  %v196 = vpop.f32.mrb[0].mxu0
  %v197 = vadd.f32 0.0, %v196
  %v198 = vpop.f32.mrb[0].mxu0
  %v199 = vadd.f32 0.0, %v198
  %200 = vmatprep.mubr.bf16.mxu0 0
  %201 = vmatmul.mubr.bf16.gmra.mrb[0].mxu0 %v143
  %v202 = vpop.f32.mrb[0].mxu0
  %v203 = vadd.f32 0.0, %v202
  %v204 = vpop.f32.mrb[0].mxu0
  %v205 = vadd.f32 0.0, %v204
  %v206 = vpop.f32.mrb[0].mxu0
  %v207 = vadd.f32 0.0, %v206
  %v208 = vpop.f32.mrb[0].mxu0
  %v209 = vadd.f32 0.0, %v208
  %210 = vmatprep.mubr.bf16.mxu0 0
  %211 = vmatmul.mubr.bf16.gmra.mrb[0].mxu0 %v146
  %v212 = vpop.f32.mrb[0].mxu0
  %v213 = vadd.f32 0.0, %v212
  %v214 = vpop.f32.mrb[0].mxu0
  %v215 = vadd.f32 0.0, %v214
  %v216 = vpop.f32.mrb[0].mxu0
  %v217 = vadd.f32 0.0, %v216
  %v218 = vpop.f32.mrb[0].mxu0
  %v219 = vadd.f32 0.0, %v218
  %220 = vdwg.mxu0
  %221 = vmatprep.subr.bf16.mxu0 %v114
  %222 = vmatpush1.bf16.msra.mxu0 %v113
  %223 = vmatprep.subr.bf16.mxu0 %v118
  %224 = vmatpush1.bf16.msra.mxu0 %v117
  %225 = vmatprep.subr.bf16.mxu0 %v122
  %226 = vmatpush1.bf16.msra.mxu0 %v121
  %227 = vmatprep.subr.bf16.mxu0 0
  %228 = vmatpush1.bf16.msra.mxu0 0
  %229 = vmatprep.subr.bf16.mxu0 0
  %230 = vmatpush1.bf16.msra.mxu0 0
  %231 = vmatprep.subr.bf16.mxu0 0
  %232 = vmatpush1.bf16.msra.mxu0 0
  %233 = vmatprep.subr.bf16.mxu0 0
  %234 = vmatpush1.bf16.msra.mxu0 0
  %235 = vmatprep.subr.bf16.mxu0 0
  %236 = vmatpush1.bf16.msra.mxu0 0
  %237 = vmatprep.subr.bf16.mxu0 0
  %238 = vmatpush1.bf16.msra.mxu0 0
  %239 = vmatprep.subr.bf16.mxu0 0
  %240 = vmatpush1.bf16.msra.mxu0 0
  %241 = vmatprep.subr.bf16.mxu0 0
  %242 = vmatpush1.bf16.msra.mxu0 0
  %243 = vmatprep.subr.bf16.mxu0 0
  %244 = vmatpush1.bf16.msra.mxu0 0
  %245 = vmatprep.subr.bf16.mxu0 0
  %246 = vmatpush1.bf16.msra.mxu0 0
  %247 = vmatprep.subr.bf16.mxu0 0
  %248 = vmatpush1.bf16.msra.mxu0 0
  %249 = vmatprep.subr.bf16.mxu0 0
  %250 = vmatpush1.bf16.msra.mxu0 0
  %251 = vmatprep.subr.bf16.mxu0 0
  %252 = vmatpush1.bf16.msra.mxu0 0
  %253 = vmatprep.mubr.bf16.mxu0 0
  %254 = vmatmul.mubr.bf16.gmra.mrb[0].mxu0 %v137
  %v255 = vpop.f32.mrb[0].mxu0
  %v256 = vadd.f32 0.0, %v255
  %v257 = vpop.f32.mrb[0].mxu0
  %v258 = vadd.f32 0.0, %v257
  %v259 = vpop.f32.mrb[0].mxu0
  %v260 = vadd.f32 0.0, %v259
  %v261 = vpop.f32.mrb[0].mxu0
  %v262 = vadd.f32 0.0, %v261
  %263 = vmatprep.mubr.bf16.mxu0 0
  %264 = vmatmul.mubr.bf16.gmra.mrb[0].mxu0 %v140
  %v265 = vpop.f32.mrb[0].mxu0
  %v266 = vadd.f32 0.0, %v265
  %v267 = vpop.f32.mrb[0].mxu0
  %v268 = vadd.f32 0.0, %v267
  %v269 = vpop.f32.mrb[0].mxu0
  %v270 = vadd.f32 0.0, %v269
  %v271 = vpop.f32.mrb[0].mxu0
  %v272 = vadd.f32 0.0, %v271
  %273 = vmatprep.mubr.bf16.mxu0 0
  %274 = vmatmul.mubr.bf16.gmra.mrb[0].mxu0 %v143
  %v275 = vpop.f32.mrb[0].mxu0
  %v276 = vadd.f32 0.0, %v275
  %v277 = vpop.f32.mrb[0].mxu0
  %v278 = vadd.f32 0.0, %v277
  %v279 = vpop.f32.mrb[0].mxu0
  %v280 = vadd.f32 0.0, %v279
  %v281 = vpop.f32.mrb[0].mxu0
  %v282 = vadd.f32 0.0, %v281
  %283 = vmatprep.mubr.bf16.mxu0 0
  %284 = vmatmul.mubr.bf16.gmra.mrb[0].mxu0 %v146
  %v285 = vpop.f32.mrb[0].mxu0
  %v286 = vadd.f32 0.0, %v285
  %v287 = vpop.f32.mrb[0].mxu0
  %v288 = vadd.f32 0.0, %v287
  %v289 = vpop.f32.mrb[0].mxu0
  %v290 = vadd.f32 0.0, %v289
  %v291 = vpop.f32.mrb[0].mxu0
  %v292 = vadd.f32 0.0, %v291
  %293 = vdwg.mxu0
  %v306 = vunpack.c.l.b16 %v36
  %v307 = vunpack.c.h.b16 %v36
  %v308 = vunpack.c.l.b16 %v37
  %v309 = vunpack.c.h.b16 %v37
  %v310 = vunpack.c.l.b16 %v38
  %v311 = vunpack.c.h.b16 %v38
  %v312 = vunpack.c.l.b16 %v39
  %v313 = vunpack.c.h.b16 %v39
  %v314 = vunpack.c.l.b16 %v40
  %v315 = vunpack.c.h.b16 %v40
  %v316 = vunpack.c.l.b16 %v41
  %v317 = vunpack.c.h.b16 %v41
  %v318 = vunpack.c.l.b16 %v42
  %v319 = vunpack.c.h.b16 %v42
  %v320 = vunpack.c.l.b16 %v43
  %v321 = vunpack.c.h.b16 %v43
  %v322 = vunpack.c.l.b16 %v44
  %v323 = vunpack.c.h.b16 %v44
  %v324 = vunpack.c.l.b16 %v45
  %v325 = vunpack.c.h.b16 %v45
  %v326 = vunpack.c.l.b16 %v46
  %v327 = vunpack.c.h.b16 %v46
  %v328 = vunpack.c.l.b16 %v47
  %v329 = vunpack.c.h.b16 %v47
  %v330 = vpack.c.b16 %v310, %v306
  %v331 = vpack.c.b16 %v311, %v307
  %v332 = vpack.c.b16 %v312, %v308
  %v333 = vpack.c.b16 %v313, %v309
  %v334 = vpack.c.b16 %v318, %v314
  %v335 = vpack.c.b16 %v319, %v315
  %v336 = vpack.c.b16 %v320, %v316
  %v337 = vpack.c.b16 %v321, %v317
  %v338 = vpack.c.b16 %v326, %v322
  %v339 = vpack.c.b16 %v327, %v323
  %v340 = vpack.c.b16 %v328, %v324
  %v341 = vpack.c.b16 %v329, %v325
  %v355 = vsel %vm135, %v32, 0
  %v358 = vsel %vm135, %v33, 0
  %v361 = vsel %vm135, %v34, 0
  %v364 = vsel %vm135, %v35, 0
  %366 = vmatprep.subr.bf16.mxu0 %v331
  %367 = vmatpush1.bf16.msra.mxu0 %v330
  %368 = vmatprep.subr.bf16.mxu0 %v335
  %369 = vmatpush1.bf16.msra.mxu0 %v334
  %370 = vmatprep.subr.bf16.mxu0 %v339
  %371 = vmatpush1.bf16.msra.mxu0 %v338
  %372 = vmatprep.subr.bf16.mxu0 0
  %373 = vmatpush1.bf16.msra.mxu0 0
  %374 = vmatprep.subr.bf16.mxu0 0
  %375 = vmatpush1.bf16.msra.mxu0 0
  %376 = vmatprep.subr.bf16.mxu0 0
  %377 = vmatpush1.bf16.msra.mxu0 0
  %378 = vmatprep.subr.bf16.mxu0 0
  %379 = vmatpush1.bf16.msra.mxu0 0
  %380 = vmatprep.subr.bf16.mxu0 0
  %381 = vmatpush1.bf16.msra.mxu0 0
  %382 = vmatprep.subr.bf16.mxu0 0
  %383 = vmatpush1.bf16.msra.mxu0 0
  %384 = vmatprep.subr.bf16.mxu0 0
  %385 = vmatpush1.bf16.msra.mxu0 0
  %386 = vmatprep.subr.bf16.mxu0 0
  %387 = vmatpush1.bf16.msra.mxu0 0
  %388 = vmatprep.subr.bf16.mxu0 0
  %389 = vmatpush1.bf16.msra.mxu0 0
  %390 = vmatprep.subr.bf16.mxu0 0
  %391 = vmatpush1.bf16.msra.mxu0 0
  %392 = vmatprep.subr.bf16.mxu0 0
  %393 = vmatpush1.bf16.msra.mxu0 0
  %394 = vmatprep.subr.bf16.mxu0 0
  %395 = vmatpush1.bf16.msra.mxu0 0
  %396 = vmatprep.subr.bf16.mxu0 0
  %397 = vmatpush1.bf16.msra.mxu0 0
  %398 = vmatprep.mubr.bf16.mxu0 0
  %399 = vmatmul.mubr.bf16.gmra.mrb[0].mxu0 %v355
  %v400 = vpop.f32.mrb[0].mxu0
  %v401 = vadd.f32 %v183, %v400
  %v402 = vpop.f32.mrb[0].mxu0
  %v403 = vadd.f32 %v185, %v402
  %v404 = vpop.f32.mrb[0].mxu0
  %v405 = vadd.f32 %v187, %v404
  %v406 = vpop.f32.mrb[0].mxu0
  %v407 = vadd.f32 %v189, %v406
  %408 = vmatprep.mubr.bf16.mxu0 0
  %409 = vmatmul.mubr.bf16.gmra.mrb[0].mxu0 %v358
  %v410 = vpop.f32.mrb[0].mxu0
  %v411 = vadd.f32 %v193, %v410
  %v412 = vpop.f32.mrb[0].mxu0
  %v413 = vadd.f32 %v195, %v412
  %v414 = vpop.f32.mrb[0].mxu0
  %v415 = vadd.f32 %v197, %v414
  %v416 = vpop.f32.mrb[0].mxu0
  %v417 = vadd.f32 %v199, %v416
  %418 = vmatprep.mubr.bf16.mxu0 0
  %419 = vmatmul.mubr.bf16.gmra.mrb[0].mxu0 %v361
  %v420 = vpop.f32.mrb[0].mxu0
  %v421 = vadd.f32 %v203, %v420
  %v422 = vpop.f32.mrb[0].mxu0
  %v423 = vadd.f32 %v205, %v422
  %v424 = vpop.f32.mrb[0].mxu0
  %v425 = vadd.f32 %v207, %v424
  %v426 = vpop.f32.mrb[0].mxu0
  %v427 = vadd.f32 %v209, %v426
  %428 = vmatprep.mubr.bf16.mxu0 0
  %429 = vmatmul.mubr.bf16.gmra.mrb[0].mxu0 %v364
  %v430 = vpop.f32.mrb[0].mxu0
  %v431 = vadd.f32 %v213, %v430
  %v432 = vpop.f32.mrb[0].mxu0
  %v433 = vadd.f32 %v215, %v432
  %v434 = vpop.f32.mrb[0].mxu0
  %v435 = vadd.f32 %v217, %v434
  %v436 = vpop.f32.mrb[0].mxu0
  %v437 = vadd.f32 %v219, %v436
  %438 = vdwg.mxu0
  %439 = vmatprep.subr.bf16.mxu0 %v333
  %440 = vmatpush1.bf16.msra.mxu0 %v332
  %441 = vmatprep.subr.bf16.mxu0 %v337
  %442 = vmatpush1.bf16.msra.mxu0 %v336
  %443 = vmatprep.subr.bf16.mxu0 %v341
  %444 = vmatpush1.bf16.msra.mxu0 %v340
  %445 = vmatprep.subr.bf16.mxu0 0
  %446 = vmatpush1.bf16.msra.mxu0 0
  %447 = vmatprep.subr.bf16.mxu0 0
  %448 = vmatpush1.bf16.msra.mxu0 0
  %449 = vmatprep.subr.bf16.mxu0 0
  %450 = vmatpush1.bf16.msra.mxu0 0
  %451 = vmatprep.subr.bf16.mxu0 0
  %452 = vmatpush1.bf16.msra.mxu0 0
  %453 = vmatprep.subr.bf16.mxu0 0
  %454 = vmatpush1.bf16.msra.mxu0 0
  %455 = vmatprep.subr.bf16.mxu0 0
  %456 = vmatpush1.bf16.msra.mxu0 0
  %457 = vmatprep.subr.bf16.mxu0 0
  %458 = vmatpush1.bf16.msra.mxu0 0
  %459 = vmatprep.subr.bf16.mxu0 0
  %460 = vmatpush1.bf16.msra.mxu0 0
  %461 = vmatprep.subr.bf16.mxu0 0
  %462 = vmatpush1.bf16.msra.mxu0 0
  %463 = vmatprep.subr.bf16.mxu0 0
  %464 = vmatpush1.bf16.msra.mxu0 0
  %465 = vmatprep.subr.bf16.mxu0 0
  %466 = vmatpush1.bf16.msra.mxu0 0
  %467 = vmatprep.subr.bf16.mxu0 0
  %468 = vmatpush1.bf16.msra.mxu0 0
  %469 = vmatprep.subr.bf16.mxu0 0
  %470 = vmatpush1.bf16.msra.mxu0 0
  %471 = vmatprep.mubr.bf16.mxu0 0
  %472 = vmatmul.mubr.bf16.gmra.mrb[0].mxu0 %v355
  %v473 = vpop.f32.mrb[0].mxu0
  %v474 = vadd.f32 %v256, %v473
  %v475 = vpop.f32.mrb[0].mxu0
  %v476 = vadd.f32 %v258, %v475
  %v477 = vpop.f32.mrb[0].mxu0
  %v478 = vadd.f32 %v260, %v477
  %v479 = vpop.f32.mrb[0].mxu0
  %v480 = vadd.f32 %v262, %v479
  %481 = vmatprep.mubr.bf16.mxu0 0
  %482 = vmatmul.mubr.bf16.gmra.mrb[0].mxu0 %v358
  %v483 = vpop.f32.mrb[0].mxu0
  %v484 = vadd.f32 %v266, %v483
  %v485 = vpop.f32.mrb[0].mxu0
  %v486 = vadd.f32 %v268, %v485
  %v487 = vpop.f32.mrb[0].mxu0
  %v488 = vadd.f32 %v270, %v487
  %v489 = vpop.f32.mrb[0].mxu0
  %v490 = vadd.f32 %v272, %v489
  %491 = vmatprep.mubr.bf16.mxu0 0
  %492 = vmatmul.mubr.bf16.gmra.mrb[0].mxu0 %v361
  %v493 = vpop.f32.mrb[0].mxu0
  %v494 = vadd.f32 %v276, %v493
  %v495 = vpop.f32.mrb[0].mxu0
  %v496 = vadd.f32 %v278, %v495
  %v497 = vpop.f32.mrb[0].mxu0
  %v498 = vadd.f32 %v280, %v497
  %v499 = vpop.f32.mrb[0].mxu0
  %v500 = vadd.f32 %v282, %v499
  %501 = vmatprep.mubr.bf16.mxu0 0
  %502 = vmatmul.mubr.bf16.gmra.mrb[0].mxu0 %v364
  %v503 = vpop.f32.mrb[0].mxu0
  %v504 = vadd.f32 %v286, %v503
  %v505 = vpop.f32.mrb[0].mxu0
  %v506 = vadd.f32 %v288, %v505
  %v507 = vpop.f32.mrb[0].mxu0
  %v508 = vadd.f32 %v290, %v507
  %v509 = vpop.f32.mrb[0].mxu0
  %v510 = vadd.f32 %v292, %v509
  %511 = vdwg.mxu0
  %s512 = sadd.s32 0, 16
  %s513 = scalar_lea.vmem %s0, %s512
  %v514 = vld [vmem:[%s513] sm:$0xff]
  %v515 = vld [vmem:[%s513 + $0x10] sm:$0xff]
  %v516 = vld [vmem:[%s513 + $0x20] sm:$0xff]
  %v517 = vld [vmem:[%s513 + $0x30] sm:$0xff]
  %v518 = vld [vmem:[%s513 + $0x40] sm:$0xff]
  %v519 = vld [vmem:[%s513 + $0x50] sm:$0xff]
  %v520 = vld [vmem:[%s513 + $0x60] sm:$0xff]
  %v521 = vld [vmem:[%s513 + $0x70] sm:$0xff]
  %v522 = vpack.c.bf16 %v515, %v514
  %v523 = vpack.c.bf16 %v517, %v516
  %v524 = vpack.c.bf16 %v519, %v518
  %v525 = vpack.c.bf16 %v521, %v520
  %s526 = scalar_lea.vmem %s1, 192
  %v527 = vld [vmem:[%s526] sm:$0xff]
  %v528 = vld [vmem:[%s526 + $0x8] sm:$0xff]
  %v529 = vld [vmem:[%s526 + $0x10] sm:$0xff]
  %v530 = vld [vmem:[%s526 + $0x18] sm:$0xff]
  %v531 = vld [vmem:[%s526 + $0x20] sm:$0xff]
  %v532 = vld [vmem:[%s526 + $0x28] sm:$0xff]
  %v533 = vld [vmem:[%s526 + $0x30] sm:$0xff]
  %v534 = vld [vmem:[%s526 + $0x38] sm:$0xff]
  %v535 = vld [vmem:[%s526 + $0x40] sm:$0xff]
  %v536 = vld [vmem:[%s526 + $0x48] sm:$0xff]
  %v537 = vld [vmem:[%s526 + $0x50] sm:$0xff]
  %v538 = vld [vmem:[%s526 + $0x58] sm:$0xff]
  %v551 = vunpack.c.l.b16 %v527
  %v552 = vunpack.c.h.b16 %v527
  %v553 = vunpack.c.l.b16 %v528
  %v554 = vunpack.c.h.b16 %v528
  %v555 = vunpack.c.l.b16 %v529
  %v556 = vunpack.c.h.b16 %v529
  %v557 = vunpack.c.l.b16 %v530
  %v558 = vunpack.c.h.b16 %v530
  %v559 = vunpack.c.l.b16 %v531
  %v560 = vunpack.c.h.b16 %v531
  %v561 = vunpack.c.l.b16 %v532
  %v562 = vunpack.c.h.b16 %v532
  %v563 = vunpack.c.l.b16 %v533
  %v564 = vunpack.c.h.b16 %v533
  %v565 = vunpack.c.l.b16 %v534
  %v566 = vunpack.c.h.b16 %v534
  %v567 = vunpack.c.l.b16 %v535
  %v568 = vunpack.c.h.b16 %v535
  %v569 = vunpack.c.l.b16 %v536
  %v570 = vunpack.c.h.b16 %v536
  %v571 = vunpack.c.l.b16 %v537
  %v572 = vunpack.c.h.b16 %v537
  %v573 = vunpack.c.l.b16 %v538
  %v574 = vunpack.c.h.b16 %v538
  %v575 = vpack.c.b16 %v555, %v551
  %v576 = vpack.c.b16 %v556, %v552
  %v577 = vpack.c.b16 %v557, %v553
  %v578 = vpack.c.b16 %v558, %v554
  %v579 = vpack.c.b16 %v563, %v559
  %v580 = vpack.c.b16 %v564, %v560
  %v581 = vpack.c.b16 %v565, %v561
  %v582 = vpack.c.b16 %v566, %v562
  %v583 = vpack.c.b16 %v571, %v567
  %v584 = vpack.c.b16 %v572, %v568
  %v585 = vpack.c.b16 %v573, %v569
  %v586 = vpack.c.b16 %v574, %v570
  %v600 = vsel %vm135, %v522, 0
  %v603 = vsel %vm135, %v523, 0
  %v606 = vsel %vm135, %v524, 0
  %v609 = vsel %vm135, %v525, 0
  %611 = vmatprep.subr.bf16.mxu0 %v576
  %612 = vmatpush1.bf16.msra.mxu0 %v575
  %613 = vmatprep.subr.bf16.mxu0 %v580
  %614 = vmatpush1.bf16.msra.mxu0 %v579
  %615 = vmatprep.subr.bf16.mxu0 %v584
  %616 = vmatpush1.bf16.msra.mxu0 %v583
  %617 = vmatprep.subr.bf16.mxu0 0
  %618 = vmatpush1.bf16.msra.mxu0 0
  %619 = vmatprep.subr.bf16.mxu0 0
  %620 = vmatpush1.bf16.msra.mxu0 0
  %621 = vmatprep.subr.bf16.mxu0 0
  %622 = vmatpush1.bf16.msra.mxu0 0
  %623 = vmatprep.subr.bf16.mxu0 0
  %624 = vmatpush1.bf16.msra.mxu0 0
  %625 = vmatprep.subr.bf16.mxu0 0
  %626 = vmatpush1.bf16.msra.mxu0 0
  %627 = vmatprep.subr.bf16.mxu0 0
  %628 = vmatpush1.bf16.msra.mxu0 0
  %629 = vmatprep.subr.bf16.mxu0 0
  %630 = vmatpush1.bf16.msra.mxu0 0
  %631 = vmatprep.subr.bf16.mxu0 0
  %632 = vmatpush1.bf16.msra.mxu0 0
  %633 = vmatprep.subr.bf16.mxu0 0
  %634 = vmatpush1.bf16.msra.mxu0 0
  %635 = vmatprep.subr.bf16.mxu0 0
  %636 = vmatpush1.bf16.msra.mxu0 0
  %637 = vmatprep.subr.bf16.mxu0 0
  %638 = vmatpush1.bf16.msra.mxu0 0
  %639 = vmatprep.subr.bf16.mxu0 0
  %640 = vmatpush1.bf16.msra.mxu0 0
  %641 = vmatprep.subr.bf16.mxu0 0
  %642 = vmatpush1.bf16.msra.mxu0 0
  %643 = vmatprep.mubr.bf16.mxu0 0
  %644 = vmatmul.mubr.bf16.gmra.mrb[0].mxu0 %v600
  %v645 = vpop.f32.mrb[0].mxu0
  %v646 = vadd.f32 0.0, %v645
  %v647 = vpop.f32.mrb[0].mxu0
  %v648 = vadd.f32 0.0, %v647
  %v649 = vpop.f32.mrb[0].mxu0
  %v650 = vadd.f32 0.0, %v649
  %v651 = vpop.f32.mrb[0].mxu0
  %v652 = vadd.f32 0.0, %v651
  %653 = vmatprep.mubr.bf16.mxu0 0
  %654 = vmatmul.mubr.bf16.gmra.mrb[0].mxu0 %v603
  %v655 = vpop.f32.mrb[0].mxu0
  %v656 = vadd.f32 0.0, %v655
  %v657 = vpop.f32.mrb[0].mxu0
  %v658 = vadd.f32 0.0, %v657
  %v659 = vpop.f32.mrb[0].mxu0
  %v660 = vadd.f32 0.0, %v659
  %v661 = vpop.f32.mrb[0].mxu0
  %v662 = vadd.f32 0.0, %v661
  %663 = vmatprep.mubr.bf16.mxu0 0
  %664 = vmatmul.mubr.bf16.gmra.mrb[0].mxu0 %v606
  %v665 = vpop.f32.mrb[0].mxu0
  %v666 = vadd.f32 0.0, %v665
  %v667 = vpop.f32.mrb[0].mxu0
  %v668 = vadd.f32 0.0, %v667
  %v669 = vpop.f32.mrb[0].mxu0
  %v670 = vadd.f32 0.0, %v669
  %v671 = vpop.f32.mrb[0].mxu0
  %v672 = vadd.f32 0.0, %v671
  %673 = vmatprep.mubr.bf16.mxu0 0
  %674 = vmatmul.mubr.bf16.gmra.mrb[0].mxu0 %v609
  %v675 = vpop.f32.mrb[0].mxu0
  %v676 = vadd.f32 0.0, %v675
  %v677 = vpop.f32.mrb[0].mxu0
  %v678 = vadd.f32 0.0, %v677
  %v679 = vpop.f32.mrb[0].mxu0
  %v680 = vadd.f32 0.0, %v679
  %v681 = vpop.f32.mrb[0].mxu0
  %v682 = vadd.f32 0.0, %v681
  %683 = vdwg.mxu0
  %684 = vmatprep.subr.bf16.mxu0 %v578
  %685 = vmatpush1.bf16.msra.mxu0 %v577
  %686 = vmatprep.subr.bf16.mxu0 %v582
  %687 = vmatpush1.bf16.msra.mxu0 %v581
  %688 = vmatprep.subr.bf16.mxu0 %v586
  %689 = vmatpush1.bf16.msra.mxu0 %v585
  %690 = vmatprep.subr.bf16.mxu0 0
  %691 = vmatpush1.bf16.msra.mxu0 0
  %692 = vmatprep.subr.bf16.mxu0 0
  %693 = vmatpush1.bf16.msra.mxu0 0
  %694 = vmatprep.subr.bf16.mxu0 0
  %695 = vmatpush1.bf16.msra.mxu0 0
  %696 = vmatprep.subr.bf16.mxu0 0
  %697 = vmatpush1.bf16.msra.mxu0 0
  %698 = vmatprep.subr.bf16.mxu0 0
  %699 = vmatpush1.bf16.msra.mxu0 0
  %700 = vmatprep.subr.bf16.mxu0 0
  %701 = vmatpush1.bf16.msra.mxu0 0
  %702 = vmatprep.subr.bf16.mxu0 0
  %703 = vmatpush1.bf16.msra.mxu0 0
  %704 = vmatprep.subr.bf16.mxu0 0
  %705 = vmatpush1.bf16.msra.mxu0 0
  %706 = vmatprep.subr.bf16.mxu0 0
  %707 = vmatpush1.bf16.msra.mxu0 0
  %708 = vmatprep.subr.bf16.mxu0 0
  %709 = vmatpush1.bf16.msra.mxu0 0
  %710 = vmatprep.subr.bf16.mxu0 0
  %711 = vmatpush1.bf16.msra.mxu0 0
  %712 = vmatprep.subr.bf16.mxu0 0
  %713 = vmatpush1.bf16.msra.mxu0 0
  %714 = vmatprep.subr.bf16.mxu0 0
  %715 = vmatpush1.bf16.msra.mxu0 0
  %716 = vmatprep.mubr.bf16.mxu0 0
  %717 = vmatmul.mubr.bf16.gmra.mrb[0].mxu0 %v600
  %v718 = vpop.f32.mrb[0].mxu0
  %v719 = vadd.f32 0.0, %v718
  %v720 = vpop.f32.mrb[0].mxu0
  %v721 = vadd.f32 0.0, %v720
  %v722 = vpop.f32.mrb[0].mxu0
  %v723 = vadd.f32 0.0, %v722
  %v724 = vpop.f32.mrb[0].mxu0
  %v725 = vadd.f32 0.0, %v724
  %726 = vmatprep.mubr.bf16.mxu0 0
  %727 = vmatmul.mubr.bf16.gmra.mrb[0].mxu0 %v603
  %v728 = vpop.f32.mrb[0].mxu0
  %v729 = vadd.f32 0.0, %v728
  %v730 = vpop.f32.mrb[0].mxu0
  %v731 = vadd.f32 0.0, %v730
  %v732 = vpop.f32.mrb[0].mxu0
  %v733 = vadd.f32 0.0, %v732
  %v734 = vpop.f32.mrb[0].mxu0
  %v735 = vadd.f32 0.0, %v734
  %736 = vmatprep.mubr.bf16.mxu0 0
  %737 = vmatmul.mubr.bf16.gmra.mrb[0].mxu0 %v606
  %v738 = vpop.f32.mrb[0].mxu0
  %v739 = vadd.f32 0.0, %v738
  %v740 = vpop.f32.mrb[0].mxu0
  %v741 = vadd.f32 0.0, %v740
  %v742 = vpop.f32.mrb[0].mxu0
  %v743 = vadd.f32 0.0, %v742
  %v744 = vpop.f32.mrb[0].mxu0
  %v745 = vadd.f32 0.0, %v744
  %746 = vmatprep.mubr.bf16.mxu0 0
  %747 = vmatmul.mubr.bf16.gmra.mrb[0].mxu0 %v609
  %v748 = vpop.f32.mrb[0].mxu0
  %v749 = vadd.f32 0.0, %v748
  %v750 = vpop.f32.mrb[0].mxu0
  %v751 = vadd.f32 0.0, %v750
  %v752 = vpop.f32.mrb[0].mxu0
  %v753 = vadd.f32 0.0, %v752
  %v754 = vpop.f32.mrb[0].mxu0
  %v755 = vadd.f32 0.0, %v754
  %756 = vdwg.mxu0
  %v757 = vadd.f32 %v401, %v646
  %v758 = vadd.f32 %v403, %v648
  %v759 = vadd.f32 %v474, %v719
  %v760 = vadd.f32 %v476, %v721
  %v761 = vadd.f32 %v405, %v650
  %v762 = vadd.f32 %v407, %v652
  %v763 = vadd.f32 %v478, %v723
  %v764 = vadd.f32 %v480, %v725
  %v765 = vadd.f32 %v411, %v656
  %v766 = vadd.f32 %v413, %v658
  %v767 = vadd.f32 %v484, %v729
  %v768 = vadd.f32 %v486, %v731
  %v769 = vadd.f32 %v415, %v660
  %v770 = vadd.f32 %v417, %v662
  %v771 = vadd.f32 %v488, %v733
  %v772 = vadd.f32 %v490, %v735
  %v773 = vadd.f32 %v421, %v666
  %v774 = vadd.f32 %v423, %v668
  %v775 = vadd.f32 %v494, %v739
  %v776 = vadd.f32 %v496, %v741
  %v777 = vadd.f32 %v425, %v670
  %v778 = vadd.f32 %v427, %v672
  %v779 = vadd.f32 %v498, %v743
  %v780 = vadd.f32 %v500, %v745
  %v781 = vadd.f32 %v431, %v676
  %v782 = vadd.f32 %v433, %v678
  %v783 = vadd.f32 %v504, %v749
  %v784 = vadd.f32 %v506, %v751
  %v785 = vadd.f32 %v435, %v680
  %v786 = vadd.f32 %v437, %v682
  %v787 = vadd.f32 %v508, %v753
  %v788 = vadd.f32 %v510, %v755
  %s789 = sadd.s32 0, 24
  %s790 = scalar_lea.vmem %s0, %s789
  %v791 = vld [vmem:[%s790] sm:$0xff]
  %v792 = vld [vmem:[%s790 + $0x10] sm:$0xff]
  %v793 = vld [vmem:[%s790 + $0x20] sm:$0xff]
  %v794 = vld [vmem:[%s790 + $0x30] sm:$0xff]
  %v795 = vld [vmem:[%s790 + $0x40] sm:$0xff]
  %v796 = vld [vmem:[%s790 + $0x50] sm:$0xff]
  %v797 = vld [vmem:[%s790 + $0x60] sm:$0xff]
  %v798 = vld [vmem:[%s790 + $0x70] sm:$0xff]
  %v799 = vpack.c.bf16 %v792, %v791
  %v800 = vpack.c.bf16 %v794, %v793
  %v801 = vpack.c.bf16 %v796, %v795
  %v802 = vpack.c.bf16 %v798, %v797
  %s803 = scalar_lea.vmem %s1, 288
  %v804 = vld [vmem:[%s803] sm:$0xff]
  %v805 = vld [vmem:[%s803 + $0x8] sm:$0xff]
  %v806 = vld [vmem:[%s803 + $0x10] sm:$0xff]
  %v807 = vld [vmem:[%s803 + $0x18] sm:$0xff]
  %v808 = vld [vmem:[%s803 + $0x20] sm:$0xff]
  %v809 = vld [vmem:[%s803 + $0x28] sm:$0xff]
  %v810 = vld [vmem:[%s803 + $0x30] sm:$0xff]
  %v811 = vld [vmem:[%s803 + $0x38] sm:$0xff]
  %v812 = vld [vmem:[%s803 + $0x40] sm:$0xff]
  %v813 = vld [vmem:[%s803 + $0x48] sm:$0xff]
  %v814 = vld [vmem:[%s803 + $0x50] sm:$0xff]
  %v815 = vld [vmem:[%s803 + $0x58] sm:$0xff]
  %v828 = vunpack.c.l.b16 %v804
  %v829 = vunpack.c.h.b16 %v804
  %v830 = vunpack.c.l.b16 %v805
  %v831 = vunpack.c.h.b16 %v805
  %v832 = vunpack.c.l.b16 %v806
  %v833 = vunpack.c.h.b16 %v806
  %v834 = vunpack.c.l.b16 %v807
  %v835 = vunpack.c.h.b16 %v807
  %v836 = vunpack.c.l.b16 %v808
  %v837 = vunpack.c.h.b16 %v808
  %v838 = vunpack.c.l.b16 %v809
  %v839 = vunpack.c.h.b16 %v809
  %v840 = vunpack.c.l.b16 %v810
  %v841 = vunpack.c.h.b16 %v810
  %v842 = vunpack.c.l.b16 %v811
  %v843 = vunpack.c.h.b16 %v811
  %v844 = vunpack.c.l.b16 %v812
  %v845 = vunpack.c.h.b16 %v812
  %v846 = vunpack.c.l.b16 %v813
  %v847 = vunpack.c.h.b16 %v813
  %v848 = vunpack.c.l.b16 %v814
  %v849 = vunpack.c.h.b16 %v814
  %v850 = vunpack.c.l.b16 %v815
  %v851 = vunpack.c.h.b16 %v815
  %v852 = vpack.c.b16 %v832, %v828
  %v853 = vpack.c.b16 %v833, %v829
  %v854 = vpack.c.b16 %v834, %v830
  %v855 = vpack.c.b16 %v835, %v831
  %v856 = vpack.c.b16 %v840, %v836
  %v857 = vpack.c.b16 %v841, %v837
  %v858 = vpack.c.b16 %v842, %v838
  %v859 = vpack.c.b16 %v843, %v839
  %v860 = vpack.c.b16 %v848, %v844
  %v861 = vpack.c.b16 %v849, %v845
  %v862 = vpack.c.b16 %v850, %v846
  %v863 = vpack.c.b16 %v851, %v847
  %v877 = vsel %vm135, %v799, 0
  %v880 = vsel %vm135, %v800, 0
  %v883 = vsel %vm135, %v801, 0
  %v886 = vsel %vm135, %v802, 0
  %888 = vmatprep.subr.bf16.mxu0 %v853
  %889 = vmatpush1.bf16.msra.mxu0 %v852
  %890 = vmatprep.subr.bf16.mxu0 %v857
  %891 = vmatpush1.bf16.msra.mxu0 %v856
  %892 = vmatprep.subr.bf16.mxu0 %v861
  %893 = vmatpush1.bf16.msra.mxu0 %v860
  %894 = vmatprep.subr.bf16.mxu0 0
  %895 = vmatpush1.bf16.msra.mxu0 0
  %896 = vmatprep.subr.bf16.mxu0 0
  %897 = vmatpush1.bf16.msra.mxu0 0
  %898 = vmatprep.subr.bf16.mxu0 0
  %899 = vmatpush1.bf16.msra.mxu0 0
  %900 = vmatprep.subr.bf16.mxu0 0
  %901 = vmatpush1.bf16.msra.mxu0 0
  %902 = vmatprep.subr.bf16.mxu0 0
  %903 = vmatpush1.bf16.msra.mxu0 0
  %904 = vmatprep.subr.bf16.mxu0 0
  %905 = vmatpush1.bf16.msra.mxu0 0
  %906 = vmatprep.subr.bf16.mxu0 0
  %907 = vmatpush1.bf16.msra.mxu0 0
  %908 = vmatprep.subr.bf16.mxu0 0
  %909 = vmatpush1.bf16.msra.mxu0 0
  %910 = vmatprep.subr.bf16.mxu0 0
  %911 = vmatpush1.bf16.msra.mxu0 0
  %912 = vmatprep.subr.bf16.mxu0 0
  %913 = vmatpush1.bf16.msra.mxu0 0
  %914 = vmatprep.subr.bf16.mxu0 0
  %915 = vmatpush1.bf16.msra.mxu0 0
  %916 = vmatprep.subr.bf16.mxu0 0
  %917 = vmatpush1.bf16.msra.mxu0 0
  %918 = vmatprep.subr.bf16.mxu0 0
  %919 = vmatpush1.bf16.msra.mxu0 0
  %920 = vmatprep.mubr.bf16.mxu0 0
  %921 = vmatmul.mubr.bf16.gmra.mrb[0].mxu0 %v877
  %v922 = vpop.f32.mrb[0].mxu0
  %v923 = vadd.f32 0.0, %v922
  %v924 = vpop.f32.mrb[0].mxu0
  %v925 = vadd.f32 0.0, %v924
  %v926 = vpop.f32.mrb[0].mxu0
  %v927 = vadd.f32 0.0, %v926
  %v928 = vpop.f32.mrb[0].mxu0
  %v929 = vadd.f32 0.0, %v928
  %930 = vmatprep.mubr.bf16.mxu0 0
  %931 = vmatmul.mubr.bf16.gmra.mrb[0].mxu0 %v880
  %v932 = vpop.f32.mrb[0].mxu0
  %v933 = vadd.f32 0.0, %v932
  %v934 = vpop.f32.mrb[0].mxu0
  %v935 = vadd.f32 0.0, %v934
  %v936 = vpop.f32.mrb[0].mxu0
  %v937 = vadd.f32 0.0, %v936
  %v938 = vpop.f32.mrb[0].mxu0
  %v939 = vadd.f32 0.0, %v938
  %940 = vmatprep.mubr.bf16.mxu0 0
  %941 = vmatmul.mubr.bf16.gmra.mrb[0].mxu0 %v883
  %v942 = vpop.f32.mrb[0].mxu0
  %v943 = vadd.f32 0.0, %v942
  %v944 = vpop.f32.mrb[0].mxu0
  %v945 = vadd.f32 0.0, %v944
  %v946 = vpop.f32.mrb[0].mxu0
  %v947 = vadd.f32 0.0, %v946
  %v948 = vpop.f32.mrb[0].mxu0
  %v949 = vadd.f32 0.0, %v948
  %950 = vmatprep.mubr.bf16.mxu0 0
  %951 = vmatmul.mubr.bf16.gmra.mrb[0].mxu0 %v886
  %v952 = vpop.f32.mrb[0].mxu0
  %v953 = vadd.f32 0.0, %v952
  %v954 = vpop.f32.mrb[0].mxu0
  %v955 = vadd.f32 0.0, %v954
  %v956 = vpop.f32.mrb[0].mxu0
  %v957 = vadd.f32 0.0, %v956
  %v958 = vpop.f32.mrb[0].mxu0
  %v959 = vadd.f32 0.0, %v958
  %960 = vdwg.mxu0
  %961 = vmatprep.subr.bf16.mxu0 %v855
  %962 = vmatpush1.bf16.msra.mxu0 %v854
  %963 = vmatprep.subr.bf16.mxu0 %v859
  %964 = vmatpush1.bf16.msra.mxu0 %v858
  %965 = vmatprep.subr.bf16.mxu0 %v863
  %966 = vmatpush1.bf16.msra.mxu0 %v862
  %967 = vmatprep.subr.bf16.mxu0 0
  %968 = vmatpush1.bf16.msra.mxu0 0
  %969 = vmatprep.subr.bf16.mxu0 0
  %970 = vmatpush1.bf16.msra.mxu0 0
  %971 = vmatprep.subr.bf16.mxu0 0
  %972 = vmatpush1.bf16.msra.mxu0 0
  %973 = vmatprep.subr.bf16.mxu0 0
  %974 = vmatpush1.bf16.msra.mxu0 0
  %975 = vmatprep.subr.bf16.mxu0 0
  %976 = vmatpush1.bf16.msra.mxu0 0
  %977 = vmatprep.subr.bf16.mxu0 0
  %978 = vmatpush1.bf16.msra.mxu0 0
  %979 = vmatprep.subr.bf16.mxu0 0
  %980 = vmatpush1.bf16.msra.mxu0 0
  %981 = vmatprep.subr.bf16.mxu0 0
  %982 = vmatpush1.bf16.msra.mxu0 0
  %983 = vmatprep.subr.bf16.mxu0 0
  %984 = vmatpush1.bf16.msra.mxu0 0
  %985 = vmatprep.subr.bf16.mxu0 0
  %986 = vmatpush1.bf16.msra.mxu0 0
  %987 = vmatprep.subr.bf16.mxu0 0
  %988 = vmatpush1.bf16.msra.mxu0 0
  %989 = vmatprep.subr.bf16.mxu0 0
  %990 = vmatpush1.bf16.msra.mxu0 0
  %991 = vmatprep.subr.bf16.mxu0 0
  %992 = vmatpush1.bf16.msra.mxu0 0
  %993 = vmatprep.mubr.bf16.mxu0 0
  %994 = vmatmul.mubr.bf16.gmra.mrb[0].mxu0 %v877
  %v995 = vpop.f32.mrb[0].mxu0
  %v996 = vadd.f32 0.0, %v995
  %v997 = vpop.f32.mrb[0].mxu0
  %v998 = vadd.f32 0.0, %v997
  %v999 = vpop.f32.mrb[0].mxu0
  %v1000 = vadd.f32 0.0, %v999
  %v1001 = vpop.f32.mrb[0].mxu0
  %v1002 = vadd.f32 0.0, %v1001
  %1003 = vmatprep.mubr.bf16.mxu0 0
  %1004 = vmatmul.mubr.bf16.gmra.mrb[0].mxu0 %v880
  %v1005 = vpop.f32.mrb[0].mxu0
  %v1006 = vadd.f32 0.0, %v1005
  %v1007 = vpop.f32.mrb[0].mxu0
  %v1008 = vadd.f32 0.0, %v1007
  %v1009 = vpop.f32.mrb[0].mxu0
  %v1010 = vadd.f32 0.0, %v1009
  %v1011 = vpop.f32.mrb[0].mxu0
  %v1012 = vadd.f32 0.0, %v1011
  %1013 = vmatprep.mubr.bf16.mxu0 0
  %1014 = vmatmul.mubr.bf16.gmra.mrb[0].mxu0 %v883
  %v1015 = vpop.f32.mrb[0].mxu0
  %v1016 = vadd.f32 0.0, %v1015
  %v1017 = vpop.f32.mrb[0].mxu0
  %v1018 = vadd.f32 0.0, %v1017
  %v1019 = vpop.f32.mrb[0].mxu0
  %v1020 = vadd.f32 0.0, %v1019
  %v1021 = vpop.f32.mrb[0].mxu0
  %v1022 = vadd.f32 0.0, %v1021
  %1023 = vmatprep.mubr.bf16.mxu0 0
  %1024 = vmatmul.mubr.bf16.gmra.mrb[0].mxu0 %v886
  %v1025 = vpop.f32.mrb[0].mxu0
  %v1026 = vadd.f32 0.0, %v1025
  %v1027 = vpop.f32.mrb[0].mxu0
  %v1028 = vadd.f32 0.0, %v1027
  %v1029 = vpop.f32.mrb[0].mxu0
  %v1030 = vadd.f32 0.0, %v1029
  %v1031 = vpop.f32.mrb[0].mxu0
  %v1032 = vadd.f32 0.0, %v1031
  %1033 = vdwg.mxu0
  %v1034 = vadd.f32 %v757, %v923
  %v1035 = vadd.f32 %v758, %v925
  %v1036 = vadd.f32 %v759, %v996
  %v1037 = vadd.f32 %v760, %v998
  %v1038 = vadd.f32 %v761, %v927
  %v1039 = vadd.f32 %v762, %v929
  %v1040 = vadd.f32 %v763, %v1000
  %v1041 = vadd.f32 %v764, %v1002
  %v1042 = vadd.f32 %v765, %v933
  %v1043 = vadd.f32 %v766, %v935
  %v1044 = vadd.f32 %v767, %v1006
  %v1045 = vadd.f32 %v768, %v1008
  %v1046 = vadd.f32 %v769, %v937
  %v1047 = vadd.f32 %v770, %v939
  %v1048 = vadd.f32 %v771, %v1010
  %v1049 = vadd.f32 %v772, %v1012
  %v1050 = vadd.f32 %v773, %v943
  %v1051 = vadd.f32 %v774, %v945
  %v1052 = vadd.f32 %v775, %v1016
  %v1053 = vadd.f32 %v776, %v1018
  %v1054 = vadd.f32 %v777, %v947
  %v1055 = vadd.f32 %v778, %v949
  %v1056 = vadd.f32 %v779, %v1020
  %v1057 = vadd.f32 %v780, %v1022
  %v1058 = vadd.f32 %v781, %v953
  %v1059 = vadd.f32 %v782, %v955
  %v1060 = vadd.f32 %v783, %v1026
  %v1061 = vadd.f32 %v784, %v1028
  %v1062 = vadd.f32 %v785, %v957
  %v1063 = vadd.f32 %v786, %v959
  %v1064 = vadd.f32 %v787, %v1030
  %v1065 = vadd.f32 %v788, %v1032
  %v1066 = vmax.f32 %v1034, %v1035
  %v1067 = vmax.f32 %v1038, %v1039
  %v1068 = vmax.f32 %v1042, %v1043
  %v1069 = vmax.f32 %v1046, %v1047
  %v1070 = vmax.f32 %v1050, %v1051
  %v1071 = vmax.f32 %v1054, %v1055
  %v1072 = vmax.f32 %v1058, %v1059
  %v1073 = vmax.f32 %v1062, %v1063
  %v1074 = vmax.f32 %v1036, %v1037
  %v1075 = vmax.f32 %v1040, %v1041
  %v1076 = vmax.f32 %v1044, %v1045
  %v1077 = vmax.f32 %v1048, %v1049
  %v1078 = vmax.f32 %v1052, %v1053
  %v1079 = vmax.f32 %v1056, %v1057
  %v1080 = vmax.f32 %v1060, %v1061
  %v1081 = vmax.f32 %v1064, %v1065
  %v1082 = vmax.f32 %v1066, %v1074
  %v1083 = vmax.f32 %v1067, %v1075
  %v1084 = vmax.f32 %v1068, %v1076
  %v1085 = vmax.f32 %v1069, %v1077
  %v1086 = vmax.f32 %v1070, %v1078
  %v1087 = vmax.f32 %v1071, %v1079
  %v1088 = vmax.f32 %v1072, %v1080
  %v1089 = vmax.f32 %v1073, %v1081
  %v1090 = vld [vmem:[%s2] sm:$0x1]
  %v1092 = vlaneseq
  %v1093 = vshrl.u32 %v1092, 7
  %v1094 = vsub.s32 0, %v1093
  %v1095 = vrot.slane %v1090, %v1094
  %v1097 = vadd.f32 %v1082, %v1095
  %v1098 = vadd.f32 %v1083, %v1095
  %v1099 = vadd.f32 %v1084, %v1095
  %v1100 = vadd.f32 %v1085, %v1095
  %v1101 = vadd.f32 %v1086, %v1095
  %v1102 = vadd.f32 %v1087, %v1095
  %v1103 = vadd.f32 %v1088, %v1095
  %v1104 = vadd.f32 %v1089, %v1095
  %v1105 = vmax.f32 %v1097, 0.0
  %v1106 = vmax.f32 %v1098, 0.0
  %v1107 = vmax.f32 %v1099, 0.0
  %v1108 = vmax.f32 %v1100, 0.0
  %v1109 = vmax.f32 %v1101, 0.0
  %v1110 = vmax.f32 %v1102, 0.0
  %v1111 = vmax.f32 %v1103, 0.0
  %v1112 = vmax.f32 %v1104, 0.0
  %s1113 = scalar_lea.vmem [#allocation2], 8
  %1114 = vst [vmem:[%s1113] sm:$0xff] %v1105
  %1115 = vst [vmem:[%s1113 + $0x8] sm:$0xff] %v1106
  %1116 = vst [vmem:[%s1113 + $0x10] sm:$0xff] %v1107
  %1117 = vst [vmem:[%s1113 + $0x18] sm:$0xff] %v1108
  %1118 = vst [vmem:[%s1113 + $0x20] sm:$0xff] %v1109
  %1119 = vst [vmem:[%s1113 + $0x28] sm:$0xff] %v1110
  %1120 = vst [vmem:[%s1113 + $0x30] sm:$0xff] %v1111
  %1121 = vst [vmem:[%s1113 + $0x38] sm:$0xff] %v1112
  %v1122 = vld [vmem:[#allocation2] sm:$0xff]
  %v1123 = vld [vmem:[#allocation2 + $0x10] sm:$0xff]
  %v1124 = vld [vmem:[#allocation2 + $0x20] sm:$0xff]
  %v1125 = vld [vmem:[#allocation2 + $0x30] sm:$0xff]
  %v1126 = vpack.c.bf16 %v1123, %v1122
  %v1127 = vpack.c.bf16 %v1125, %v1124
  %v1128 = vld [vmem:[%s3] sm:$0xf]
  %v1129 = vld [vmem:[%s3 + $0x4] sm:$0xf]
  %v1130 = vld [vmem:[%s3 + $0x8] sm:$0xf]
  %v1131 = vld [vmem:[%s3 + $0xc] sm:$0xf]
  %v1132 = vld [vmem:[%s3 + $0x10] sm:$0xf]
  %v1133 = vld [vmem:[%s3 + $0x14] sm:$0xf]
  %v1134 = vld [vmem:[%s3 + $0x18] sm:$0xf]
  %v1135 = vld [vmem:[%s3 + $0x1c] sm:$0xf]
  %v1136 = vld [vmem:[%s3 + $0x20] sm:$0xf]
  %v1137 = vld [vmem:[%s3 + $0x24] sm:$0xf]
  %v1138 = vld [vmem:[%s3 + $0x28] sm:$0xf]
  %v1139 = vld [vmem:[%s3 + $0x2c] sm:$0xf]
  %v1140 = vld [vmem:[%s3 + $0x30] sm:$0xf]
  %v1141 = vld [vmem:[%s3 + $0x34] sm:$0xf]
  %v1142 = vld [vmem:[%s3 + $0x38] sm:$0xf]
  %v1143 = vld [vmem:[%s3 + $0x3c] sm:$0xf]
  %v1144 = vld [vmem:[%s1113] sm:$0xff]
  %v1145 = vld [vmem:[%s1113 + $0x10] sm:$0xff]
  %v1146 = vld [vmem:[%s1113 + $0x20] sm:$0xff]
  %v1147 = vld [vmem:[%s1113 + $0x30] sm:$0xff]
  %v1148 = vpack.c.bf16 %v1145, %v1144
  %v1149 = vpack.c.bf16 %v1147, %v1146
  %s1150 = scalar_lea.vmem %s3, 64
  %v1151 = vld [vmem:[%s1150] sm:$0xf]
  %v1152 = vld [vmem:[%s1150 + $0x4] sm:$0xf]
  %v1153 = vld [vmem:[%s1150 + $0x8] sm:$0xf]
  %v1154 = vld [vmem:[%s1150 + $0xc] sm:$0xf]
  %v1155 = vld [vmem:[%s1150 + $0x10] sm:$0xf]
  %v1156 = vld [vmem:[%s1150 + $0x14] sm:$0xf]
  %v1157 = vld [vmem:[%s1150 + $0x18] sm:$0xf]
  %v1158 = vld [vmem:[%s1150 + $0x1c] sm:$0xf]
  %v1159 = vld [vmem:[%s1150 + $0x20] sm:$0xf]
  %v1160 = vld [vmem:[%s1150 + $0x24] sm:$0xf]
  %v1161 = vld [vmem:[%s1150 + $0x28] sm:$0xf]
  %v1162 = vld [vmem:[%s1150 + $0x2c] sm:$0xf]
  %v1163 = vld [vmem:[%s1150 + $0x30] sm:$0xf]
  %v1164 = vld [vmem:[%s1150 + $0x34] sm:$0xf]
  %v1165 = vld [vmem:[%s1150 + $0x38] sm:$0xf]
  %v1166 = vld [vmem:[%s1150 + $0x3c] sm:$0xf]
  %v1183 = vunpack.c.l.b16 %v1151
  %v1184 = vunpack.c.l.b16 %v1152
  %v1185 = vunpack.c.l.b16 %v1153
  %v1186 = vunpack.c.l.b16 %v1154
  %v1187 = vunpack.c.l.b16 %v1155
  %v1188 = vunpack.c.l.b16 %v1156
  %v1189 = vunpack.c.l.b16 %v1157
  %v1190 = vunpack.c.l.b16 %v1158
  %v1191 = vunpack.c.l.b16 %v1159
  %v1192 = vunpack.c.l.b16 %v1160
  %v1193 = vunpack.c.l.b16 %v1161
  %v1194 = vunpack.c.l.b16 %v1162
  %v1195 = vunpack.c.l.b16 %v1163
  %v1196 = vunpack.c.l.b16 %v1164
  %v1197 = vunpack.c.l.b16 %v1165
  %v1198 = vunpack.c.l.b16 %v1166
  %v1199 = vpack.c.b16 %v1184, %v1183
  %v1200 = vpack.c.b16 %v1186, %v1185
  %v1201 = vpack.c.b16 %v1188, %v1187
  %v1202 = vpack.c.b16 %v1190, %v1189
  %v1203 = vpack.c.b16 %v1192, %v1191
  %v1204 = vpack.c.b16 %v1194, %v1193
  %v1205 = vpack.c.b16 %v1196, %v1195
  %v1206 = vpack.c.b16 %v1198, %v1197
  %1215 = vmatprep.subr.bf16.mxu0 0
  %1216 = vmatpush1.bf16.msra.mxu0 %v1199
  %1217 = vmatprep.subr.bf16.mxu0 0
  %1218 = vmatpush1.bf16.msra.mxu0 %v1200
  %1219 = vmatprep.subr.bf16.mxu0 0
  %1220 = vmatpush1.bf16.msra.mxu0 %v1201
  %1221 = vmatprep.subr.bf16.mxu0 0
  %1222 = vmatpush1.bf16.msra.mxu0 %v1202
  %1223 = vmatprep.subr.bf16.mxu0 0
  %1224 = vmatpush1.bf16.msra.mxu0 %v1203
  %1225 = vmatprep.subr.bf16.mxu0 0
  %1226 = vmatpush1.bf16.msra.mxu0 %v1204
  %1227 = vmatprep.subr.bf16.mxu0 0
  %1228 = vmatpush1.bf16.msra.mxu0 %v1205
  %1229 = vmatprep.subr.bf16.mxu0 0
  %1230 = vmatpush1.bf16.msra.mxu0 %v1206
  %1231 = vmatprep.subr.bf16.mxu0 0
  %1232 = vmatpush1.bf16.msra.mxu0 0
  %1233 = vmatprep.subr.bf16.mxu0 0
  %1234 = vmatpush1.bf16.msra.mxu0 0
  %1235 = vmatprep.subr.bf16.mxu0 0
  %1236 = vmatpush1.bf16.msra.mxu0 0
  %1237 = vmatprep.subr.bf16.mxu0 0
  %1238 = vmatpush1.bf16.msra.mxu0 0
  %1239 = vmatprep.subr.bf16.mxu0 0
  %1240 = vmatpush1.bf16.msra.mxu0 0
  %1241 = vmatprep.subr.bf16.mxu0 0
  %1242 = vmatpush1.bf16.msra.mxu0 0
  %1243 = vmatprep.subr.bf16.mxu0 0
  %1244 = vmatpush1.bf16.msra.mxu0 0
  %1245 = vmatprep.subr.bf16.mxu0 0
  %1246 = vmatpush1.bf16.msra.mxu0 0
  %1247 = vmatprep.mubr.bf16.mxu0 0
  %1248 = vmatmul.mubr.bf16.gmra.mrb[0].mxu0 %v1148
  %v1249 = vpop.f32.mrb[0].mxu0
  %v1250 = vadd.f32 0.0, %v1249
  %v1251 = vpop.f32.mrb[0].mxu0
  %v1252 = vpop.f32.mrb[0].mxu0
  %v1253 = vadd.f32 0.0, %v1252
  %v1254 = vpop.f32.mrb[0].mxu0
  %1255 = vmatprep.mubr.bf16.mxu0 0
  %1256 = vmatmul.mubr.bf16.gmra.mrb[0].mxu0 %v1149
  %v1257 = vpop.f32.mrb[0].mxu0
  %v1258 = vadd.f32 0.0, %v1257
  %v1259 = vpop.f32.mrb[0].mxu0
  %v1260 = vpop.f32.mrb[0].mxu0
  %v1261 = vadd.f32 0.0, %v1260
  %v1262 = vpop.f32.mrb[0].mxu0
  %1263 = vdwg.mxu0
  %v1280 = vunpack.c.l.b16 %v1128
  %v1281 = vunpack.c.l.b16 %v1129
  %v1282 = vunpack.c.l.b16 %v1130
  %v1283 = vunpack.c.l.b16 %v1131
  %v1284 = vunpack.c.l.b16 %v1132
  %v1285 = vunpack.c.l.b16 %v1133
  %v1286 = vunpack.c.l.b16 %v1134
  %v1287 = vunpack.c.l.b16 %v1135
  %v1288 = vunpack.c.l.b16 %v1136
  %v1289 = vunpack.c.l.b16 %v1137
  %v1290 = vunpack.c.l.b16 %v1138
  %v1291 = vunpack.c.l.b16 %v1139
  %v1292 = vunpack.c.l.b16 %v1140
  %v1293 = vunpack.c.l.b16 %v1141
  %v1294 = vunpack.c.l.b16 %v1142
  %v1295 = vunpack.c.l.b16 %v1143
  %v1296 = vpack.c.b16 %v1281, %v1280
  %v1297 = vpack.c.b16 %v1283, %v1282
  %v1298 = vpack.c.b16 %v1285, %v1284
  %v1299 = vpack.c.b16 %v1287, %v1286
  %v1300 = vpack.c.b16 %v1289, %v1288
  %v1301 = vpack.c.b16 %v1291, %v1290
  %v1302 = vpack.c.b16 %v1293, %v1292
  %v1303 = vpack.c.b16 %v1295, %v1294
  %1312 = vmatprep.subr.bf16.mxu0 0
  %1313 = vmatpush1.bf16.msra.mxu0 %v1296
  %1314 = vmatprep.subr.bf16.mxu0 0
  %1315 = vmatpush1.bf16.msra.mxu0 %v1297
  %1316 = vmatprep.subr.bf16.mxu0 0
  %1317 = vmatpush1.bf16.msra.mxu0 %v1298
  %1318 = vmatprep.subr.bf16.mxu0 0
  %1319 = vmatpush1.bf16.msra.mxu0 %v1299
  %1320 = vmatprep.subr.bf16.mxu0 0
  %1321 = vmatpush1.bf16.msra.mxu0 %v1300
  %1322 = vmatprep.subr.bf16.mxu0 0
  %1323 = vmatpush1.bf16.msra.mxu0 %v1301
  %1324 = vmatprep.subr.bf16.mxu0 0
  %1325 = vmatpush1.bf16.msra.mxu0 %v1302
  %1326 = vmatprep.subr.bf16.mxu0 0
  %1327 = vmatpush1.bf16.msra.mxu0 %v1303
  %1328 = vmatprep.subr.bf16.mxu0 0
  %1329 = vmatpush1.bf16.msra.mxu0 0
  %1330 = vmatprep.subr.bf16.mxu0 0
  %1331 = vmatpush1.bf16.msra.mxu0 0
  %1332 = vmatprep.subr.bf16.mxu0 0
  %1333 = vmatpush1.bf16.msra.mxu0 0
  %1334 = vmatprep.subr.bf16.mxu0 0
  %1335 = vmatpush1.bf16.msra.mxu0 0
  %1336 = vmatprep.subr.bf16.mxu0 0
  %1337 = vmatpush1.bf16.msra.mxu0 0
  %1338 = vmatprep.subr.bf16.mxu0 0
  %1339 = vmatpush1.bf16.msra.mxu0 0
  %1340 = vmatprep.subr.bf16.mxu0 0
  %1341 = vmatpush1.bf16.msra.mxu0 0
  %1342 = vmatprep.subr.bf16.mxu0 0
  %1343 = vmatpush1.bf16.msra.mxu0 0
  %1344 = vmatprep.mubr.bf16.mxu0 0
  %1345 = vmatmul.mubr.bf16.gmra.mrb[0].mxu0 %v1126
  %v1346 = vpop.f32.mrb[0].mxu0
  %v1347 = vadd.f32 %v1250, %v1346
  %v1348 = vpop.f32.mrb[0].mxu0
  %v1349 = vpop.f32.mrb[0].mxu0
  %v1350 = vadd.f32 %v1253, %v1349
  %v1351 = vpop.f32.mrb[0].mxu0
  %1352 = vmatprep.mubr.bf16.mxu0 0
  %1353 = vmatmul.mubr.bf16.gmra.mrb[0].mxu0 %v1127
  %v1354 = vpop.f32.mrb[0].mxu0
  %v1355 = vadd.f32 %v1258, %v1354
  %v1356 = vpop.f32.mrb[0].mxu0
  %v1357 = vpop.f32.mrb[0].mxu0
  %v1358 = vadd.f32 %v1261, %v1357
  %v1359 = vpop.f32.mrb[0].mxu0
  %1360 = vdwg.mxu0
  %s1361 = scalar_lea.vmem [#allocation2], 16
  %v1362 = vld [vmem:[%s1361] sm:$0xff]
  %v1363 = vld [vmem:[%s1361 + $0x10] sm:$0xff]
  %v1364 = vld [vmem:[%s1361 + $0x20] sm:$0xff]
  %v1365 = vld [vmem:[%s1361 + $0x30] sm:$0xff]
  %v1366 = vpack.c.bf16 %v1363, %v1362
  %v1367 = vpack.c.bf16 %v1365, %v1364
  %s1368 = scalar_lea.vmem %s3, 128
  %v1369 = vld [vmem:[%s1368] sm:$0xf]
  %v1370 = vld [vmem:[%s1368 + $0x4] sm:$0xf]
  %v1371 = vld [vmem:[%s1368 + $0x8] sm:$0xf]
  %v1372 = vld [vmem:[%s1368 + $0xc] sm:$0xf]
  %v1373 = vld [vmem:[%s1368 + $0x10] sm:$0xf]
  %v1374 = vld [vmem:[%s1368 + $0x14] sm:$0xf]
  %v1375 = vld [vmem:[%s1368 + $0x18] sm:$0xf]
  %v1376 = vld [vmem:[%s1368 + $0x1c] sm:$0xf]
  %v1377 = vld [vmem:[%s1368 + $0x20] sm:$0xf]
  %v1378 = vld [vmem:[%s1368 + $0x24] sm:$0xf]
  %v1379 = vld [vmem:[%s1368 + $0x28] sm:$0xf]
  %v1380 = vld [vmem:[%s1368 + $0x2c] sm:$0xf]
  %v1381 = vld [vmem:[%s1368 + $0x30] sm:$0xf]
  %v1382 = vld [vmem:[%s1368 + $0x34] sm:$0xf]
  %v1383 = vld [vmem:[%s1368 + $0x38] sm:$0xf]
  %v1384 = vld [vmem:[%s1368 + $0x3c] sm:$0xf]
  %v1401 = vunpack.c.l.b16 %v1369
  %v1402 = vunpack.c.l.b16 %v1370
  %v1403 = vunpack.c.l.b16 %v1371
  %v1404 = vunpack.c.l.b16 %v1372
  %v1405 = vunpack.c.l.b16 %v1373
  %v1406 = vunpack.c.l.b16 %v1374
  %v1407 = vunpack.c.l.b16 %v1375
  %v1408 = vunpack.c.l.b16 %v1376
  %v1409 = vunpack.c.l.b16 %v1377
  %v1410 = vunpack.c.l.b16 %v1378
  %v1411 = vunpack.c.l.b16 %v1379
  %v1412 = vunpack.c.l.b16 %v1380
  %v1413 = vunpack.c.l.b16 %v1381
  %v1414 = vunpack.c.l.b16 %v1382
  %v1415 = vunpack.c.l.b16 %v1383
  %v1416 = vunpack.c.l.b16 %v1384
  %v1417 = vpack.c.b16 %v1402, %v1401
  %v1418 = vpack.c.b16 %v1404, %v1403
  %v1419 = vpack.c.b16 %v1406, %v1405
  %v1420 = vpack.c.b16 %v1408, %v1407
  %v1421 = vpack.c.b16 %v1410, %v1409
  %v1422 = vpack.c.b16 %v1412, %v1411
  %v1423 = vpack.c.b16 %v1414, %v1413
  %v1424 = vpack.c.b16 %v1416, %v1415
  %1433 = vmatprep.subr.bf16.mxu0 0
  %1434 = vmatpush1.bf16.msra.mxu0 %v1417
  %1435 = vmatprep.subr.bf16.mxu0 0
  %1436 = vmatpush1.bf16.msra.mxu0 %v1418
  %1437 = vmatprep.subr.bf16.mxu0 0
  %1438 = vmatpush1.bf16.msra.mxu0 %v1419
  %1439 = vmatprep.subr.bf16.mxu0 0
  %1440 = vmatpush1.bf16.msra.mxu0 %v1420
  %1441 = vmatprep.subr.bf16.mxu0 0
  %1442 = vmatpush1.bf16.msra.mxu0 %v1421
  %1443 = vmatprep.subr.bf16.mxu0 0
  %1444 = vmatpush1.bf16.msra.mxu0 %v1422
  %1445 = vmatprep.subr.bf16.mxu0 0
  %1446 = vmatpush1.bf16.msra.mxu0 %v1423
  %1447 = vmatprep.subr.bf16.mxu0 0
  %1448 = vmatpush1.bf16.msra.mxu0 %v1424
  %1449 = vmatprep.subr.bf16.mxu0 0
  %1450 = vmatpush1.bf16.msra.mxu0 0
  %1451 = vmatprep.subr.bf16.mxu0 0
  %1452 = vmatpush1.bf16.msra.mxu0 0
  %1453 = vmatprep.subr.bf16.mxu0 0
  %1454 = vmatpush1.bf16.msra.mxu0 0
  %1455 = vmatprep.subr.bf16.mxu0 0
  %1456 = vmatpush1.bf16.msra.mxu0 0
  %1457 = vmatprep.subr.bf16.mxu0 0
  %1458 = vmatpush1.bf16.msra.mxu0 0
  %1459 = vmatprep.subr.bf16.mxu0 0
  %1460 = vmatpush1.bf16.msra.mxu0 0
  %1461 = vmatprep.subr.bf16.mxu0 0
  %1462 = vmatpush1.bf16.msra.mxu0 0
  %1463 = vmatprep.subr.bf16.mxu0 0
  %1464 = vmatpush1.bf16.msra.mxu0 0
  %1465 = vmatprep.mubr.bf16.mxu0 0
  %1466 = vmatmul.mubr.bf16.gmra.mrb[0].mxu0 %v1366
  %v1467 = vpop.f32.mrb[0].mxu0
  %v1468 = vadd.f32 0.0, %v1467
  %v1469 = vpop.f32.mrb[0].mxu0
  %v1470 = vpop.f32.mrb[0].mxu0
  %v1471 = vadd.f32 0.0, %v1470
  %v1472 = vpop.f32.mrb[0].mxu0
  %1473 = vmatprep.mubr.bf16.mxu0 0
  %1474 = vmatmul.mubr.bf16.gmra.mrb[0].mxu0 %v1367
  %v1475 = vpop.f32.mrb[0].mxu0
  %v1476 = vadd.f32 0.0, %v1475
  %v1477 = vpop.f32.mrb[0].mxu0
  %v1478 = vpop.f32.mrb[0].mxu0
  %v1479 = vadd.f32 0.0, %v1478
  %v1480 = vpop.f32.mrb[0].mxu0
  %1481 = vdwg.mxu0
  %v1482 = vadd.f32 %v1347, %v1468
  %v1483 = vadd.f32 %v1350, %v1471
  %v1484 = vadd.f32 %v1355, %v1476
  %v1485 = vadd.f32 %v1358, %v1479
  %s1486 = scalar_lea.vmem [#allocation2], 24
  %v1487 = vld [vmem:[%s1486] sm:$0xff]
  %v1488 = vld [vmem:[%s1486 + $0x10] sm:$0xff]
  %v1489 = vld [vmem:[%s1486 + $0x20] sm:$0xff]
  %v1490 = vld [vmem:[%s1486 + $0x30] sm:$0xff]
  %v1491 = vpack.c.bf16 %v1488, %v1487
  %v1492 = vpack.c.bf16 %v1490, %v1489
  %s1493 = scalar_lea.vmem %s3, 192
  %v1494 = vld [vmem:[%s1493] sm:$0xf]
  %v1495 = vld [vmem:[%s1493 + $0x4] sm:$0xf]
  %v1496 = vld [vmem:[%s1493 + $0x8] sm:$0xf]
  %v1497 = vld [vmem:[%s1493 + $0xc] sm:$0xf]
  %v1498 = vld [vmem:[%s1493 + $0x10] sm:$0xf]
  %v1499 = vld [vmem:[%s1493 + $0x14] sm:$0xf]
  %v1500 = vld [vmem:[%s1493 + $0x18] sm:$0xf]
  %v1501 = vld [vmem:[%s1493 + $0x1c] sm:$0xf]
  %v1502 = vld [vmem:[%s1493 + $0x20] sm:$0xf]
  %v1503 = vld [vmem:[%s1493 + $0x24] sm:$0xf]
  %v1504 = vld [vmem:[%s1493 + $0x28] sm:$0xf]
  %v1505 = vld [vmem:[%s1493 + $0x2c] sm:$0xf]
  %v1506 = vld [vmem:[%s1493 + $0x30] sm:$0xf]
  %v1507 = vld [vmem:[%s1493 + $0x34] sm:$0xf]
  %v1508 = vld [vmem:[%s1493 + $0x38] sm:$0xf]
  %v1509 = vld [vmem:[%s1493 + $0x3c] sm:$0xf]
  %v1526 = vunpack.c.l.b16 %v1494
  %v1527 = vunpack.c.l.b16 %v1495
  %v1528 = vunpack.c.l.b16 %v1496
  %v1529 = vunpack.c.l.b16 %v1497
  %v1530 = vunpack.c.l.b16 %v1498
  %v1531 = vunpack.c.l.b16 %v1499
  %v1532 = vunpack.c.l.b16 %v1500
  %v1533 = vunpack.c.l.b16 %v1501
  %v1534 = vunpack.c.l.b16 %v1502
  %v1535 = vunpack.c.l.b16 %v1503
  %v1536 = vunpack.c.l.b16 %v1504
  %v1537 = vunpack.c.l.b16 %v1505
  %v1538 = vunpack.c.l.b16 %v1506
  %v1539 = vunpack.c.l.b16 %v1507
  %v1540 = vunpack.c.l.b16 %v1508
  %v1541 = vunpack.c.l.b16 %v1509
  %v1542 = vpack.c.b16 %v1527, %v1526
  %v1543 = vpack.c.b16 %v1529, %v1528
  %v1544 = vpack.c.b16 %v1531, %v1530
  %v1545 = vpack.c.b16 %v1533, %v1532
  %v1546 = vpack.c.b16 %v1535, %v1534
  %v1547 = vpack.c.b16 %v1537, %v1536
  %v1548 = vpack.c.b16 %v1539, %v1538
  %v1549 = vpack.c.b16 %v1541, %v1540
  %1558 = vmatprep.subr.bf16.mxu0 0
  %1559 = vmatpush1.bf16.msra.mxu0 %v1542
  %1560 = vmatprep.subr.bf16.mxu0 0
  %1561 = vmatpush1.bf16.msra.mxu0 %v1543
  %1562 = vmatprep.subr.bf16.mxu0 0
  %1563 = vmatpush1.bf16.msra.mxu0 %v1544
  %1564 = vmatprep.subr.bf16.mxu0 0
  %1565 = vmatpush1.bf16.msra.mxu0 %v1545
  %1566 = vmatprep.subr.bf16.mxu0 0
  %1567 = vmatpush1.bf16.msra.mxu0 %v1546
  %1568 = vmatprep.subr.bf16.mxu0 0
  %1569 = vmatpush1.bf16.msra.mxu0 %v1547
  %1570 = vmatprep.subr.bf16.mxu0 0
  %1571 = vmatpush1.bf16.msra.mxu0 %v1548
  %1572 = vmatprep.subr.bf16.mxu0 0
  %1573 = vmatpush1.bf16.msra.mxu0 %v1549
  %1574 = vmatprep.subr.bf16.mxu0 0
  %1575 = vmatpush1.bf16.msra.mxu0 0
  %1576 = vmatprep.subr.bf16.mxu0 0
  %1577 = vmatpush1.bf16.msra.mxu0 0
  %1578 = vmatprep.subr.bf16.mxu0 0
  %1579 = vmatpush1.bf16.msra.mxu0 0
  %1580 = vmatprep.subr.bf16.mxu0 0
  %1581 = vmatpush1.bf16.msra.mxu0 0
  %1582 = vmatprep.subr.bf16.mxu0 0
  %1583 = vmatpush1.bf16.msra.mxu0 0
  %1584 = vmatprep.subr.bf16.mxu0 0
  %1585 = vmatpush1.bf16.msra.mxu0 0
  %1586 = vmatprep.subr.bf16.mxu0 0
  %1587 = vmatpush1.bf16.msra.mxu0 0
  %1588 = vmatprep.subr.bf16.mxu0 0
  %1589 = vmatpush1.bf16.msra.mxu0 0
  %1590 = vmatprep.mubr.bf16.mxu0 0
  %1591 = vmatmul.mubr.bf16.gmra.mrb[0].mxu0 %v1491
  %v1592 = vpop.f32.mrb[0].mxu0
  %v1593 = vadd.f32 0.0, %v1592
  %v1594 = vpop.f32.mrb[0].mxu0
  %v1595 = vpop.f32.mrb[0].mxu0
  %v1596 = vadd.f32 0.0, %v1595
  %v1597 = vpop.f32.mrb[0].mxu0
  %1598 = vmatprep.mubr.bf16.mxu0 0
  %1599 = vmatmul.mubr.bf16.gmra.mrb[0].mxu0 %v1492
  %v1600 = vpop.f32.mrb[0].mxu0
  %v1601 = vadd.f32 0.0, %v1600
  %v1602 = vpop.f32.mrb[0].mxu0
  %v1603 = vpop.f32.mrb[0].mxu0
  %v1604 = vadd.f32 0.0, %v1603
  %v1605 = vpop.f32.mrb[0].mxu0
  %1606 = vdwg.mxu0
  %v1607 = vadd.f32 %v1482, %v1593
  %v1608 = vadd.f32 %v1483, %v1596
  %v1609 = vadd.f32 %v1484, %v1601
  %v1610 = vadd.f32 %v1485, %v1604
  %1615 = vrot.lane.b32.xlu0 %v1607, 96
  %v1616 = vpop.permute.xlu0 %1615
  %1617 = vrot.lane.b32.xlu0 %v1608, 96
  %v1618 = vpop.permute.xlu0 %1617
  %1619 = vrot.lane.b32.xlu0 %v1609, 96
  %v1620 = vpop.permute.xlu0 %1619
  %1621 = vrot.lane.b32.xlu0 %v1610, 96
  %v1622 = vpop.permute.xlu0 %1621
  %v1627 = vmax.f32 %v1607, %v1616
  %v1628 = vmax.f32 %v1608, %v1618
  %v1629 = vmax.f32 %v1609, %v1620
  %v1630 = vmax.f32 %v1610, %v1622
  %1635 = vrot.lane.b32.xlu0 %v1627, 64
  %v1636 = vpop.permute.xlu0 %1635
  %1637 = vrot.lane.b32.xlu0 %v1628, 64
  %v1638 = vpop.permute.xlu0 %1637
  %1639 = vrot.lane.b32.xlu0 %v1629, 64
  %v1640 = vpop.permute.xlu0 %1639
  %1641 = vrot.lane.b32.xlu0 %v1630, 64
  %v1642 = vpop.permute.xlu0 %1641
  %v1647 = vmax.f32 %v1627, %v1636
  %v1648 = vmax.f32 %v1628, %v1638
  %v1649 = vmax.f32 %v1629, %v1640
  %v1650 = vmax.f32 %v1630, %v1642
  %v1651 = vld [vmem:[%s4] sm:$0x1]
  %v1653 = vlaneseq
  %v1654 = vshrl.u32 %v1653, 7
  %v1655 = vsub.s32 0, %v1654
  %v1656 = vrot.slane %v1651, %v1655
  %v1658 = vadd.f32 %v1647, %v1656
  %v1659 = vadd.f32 %v1648, %v1656
  %v1660 = vadd.f32 %v1649, %v1656
  %v1661 = vadd.f32 %v1650, %v1656
  %v1662 = vmax.f32 %v1658, 0.0
  %v1663 = vmax.f32 %v1659, 0.0
  %v1664 = vmax.f32 %v1660, 0.0
  %v1665 = vmax.f32 %v1661, 0.0
  %vm1666 = vcmask 261120
  %1667 = vst.msk [vmem:[%s5] sm:$0xff] %vm1666, %v1662
  %1668 = vst.msk [vmem:[%s5 + $0x8] sm:$0xff] %vm1666, %v1663
  %1669 = vst.msk [vmem:[%s5 + $0x10] sm:$0xff] %vm1666, %v1664
  %1670 = vst.msk [vmem:[%s5 + $0x18] sm:$0xff] %vm1666, %v1665
  // Predicated region
  $region22: #{backbone_forward.1} parent=0 // pred_check
    _
  $region23: #{backbone_forward.1} parent=0 // pred_check_branch
    %1672 = sbr.rel (0) target = $region25
  $region24: #{backbone_forward.1} parent=0 // pred_region
    _
  $region25: #{backbone_forward.1} parent=0 // pred_fallthru
    _
  // Predicated region
  $region26: #{backbone_forward.1} parent=0 // pred_check
    _
  $region27: #{backbone_forward.1} parent=0 // pred_check_branch
    %1674 = sbr.rel (0) target = $region29
  $region28: #{backbone_forward.1} parent=0 // pred_region
    _
  $region29: #{backbone_forward.1} parent=0 // pred_fallthru
    _

</llo_original>
